<compile_context>
chip_gen: v6e
topology: v6e:2x2x1
jax: 0.10.0
libtpu: 0.0.40
codegen_flags: <defaults>
</compile_context>

<pallas_src>
import jax
import jax.numpy as jnp
from jax.experimental import pallas as pl
from jax.experimental.pallas import tpu as pltpu


def _round_up(x: int, m: int) -> int:
    return (x + m - 1) // m * m


def _vmem_budget_bytes() -> int:
    """Per-generation VMEM budget (v7x: 64 MiB/TC, v5e/v6e: 128 MiB)."""
    cap = 64 * 2**20  # safe lower bound for every generation
    try:
        info = pltpu.get_tpu_info()
        c = int(getattr(info, "vmem_capacity_bytes", 0))
        if c > 0:
            cap = c
    except Exception:
        pass
    return min(cap * 3 // 4, 96 * 2**20)


def _make_encoder_kernel(num_layers, norm, true_widths, *, eps=1e-5, mxu_bf16=True):
    """Fused MLP body for a fixed layer count / norm flag / true feature widths."""

    def kernel(*refs):
        x_ref = refs[0]
        out_ref = refs[-1]
        params = refs[1:-1]

        h = x_ref[...].astype(jnp.float32)
        idx = 0
        for i in range(num_layers):
            w = params[idx][...]                              # (in_pad, out_pad)
            b = params[idx + 1][...].astype(jnp.float32)      # (1, out_pad)
            idx += 2
            if mxu_bf16:
                lhs = h.astype(jnp.bfloat16)
                rhs = w.astype(jnp.bfloat16)
            else:
                lhs = h
                rhs = w.astype(jnp.float32)
            h = jnp.dot(lhs, rhs, preferred_element_type=jnp.float32) + b
            if i < num_layers - 1:
                if norm:
                    g = params[idx][...].astype(jnp.float32)       # (1, out_pad)
                    be = params[idx + 1][...].astype(jnp.float32)  # (1, out_pad)
                    idx += 2
                    n_true = int(true_widths[i + 1])
                    inv_n = 1.0 / float(n_true)
                    # Two-pass (centered) LayerNorm over the TRUE feature count.
                    # Zero-padded lanes contribute 0 to the mean; the centered
                    # residual is masked so they contribute 0 to the variance.
                    mu = jnp.sum(h, axis=-1, keepdims=True) * inv_n
                    d = h - mu
                    if h.shape[-1] != n_true:
                        lane = jax.lax.broadcasted_iota(jnp.int32, h.shape, 1)
                        d = jnp.where(lane < n_true, d, 0.0)
                    var = jnp.sum(d * d, axis=-1, keepdims=True) * inv_n
                    # gamma/beta are zero-padded, so padded lanes stay exactly 0.
                    h = d * jax.lax.rsqrt(var + eps) * g + be
                h = jnp.maximum(h, 0.0)   # ReLU
                # TODO(synk): nn.Dropout is identity at inference; training-mode
                # dropout (pltpu.prng_random_bits mask) is intentionally omitted.
        out_ref[...] = h.astype(out_ref.dtype)

    return kernel


def encoder_forward(x, params, *, hidden, norm, batch_tile=1024, mxu_bf16=True):
    """x: (B, hidden[0]) f32.  params: flat list of (w, b[, gamma, beta]).

    Weights w_i are shaped (hidden[i], hidden[i+1]) (already transposed from the
    PyTorch (out, in) convention); biases/gamma/beta are shaped (1, hidden[i+1]).
    """
    B, d_in = x.shape
    assert d_in == hidden[0]
    num_layers = len(hidden) - 1
    d_out = hidden[-1]

    # ---- conditional lane padding of the final output ----------------------
    # Only pad when d_out is large and just off a multiple of 128; for small
    # d_out the masked narrow store is cheaper than 8x extra write DMA.
    if d_out >= 128 and d_out % 128 != 0:
        d_out_store = _round_up(d_out, 128)
    else:
        d_out_store = d_out

    # Padded feature widths: input stays true (avoids extra x HBM reads),
    # intermediate widths padded to 128 lanes, output per rule above.
    feat = [d_in] + [_round_up(w, 128) for w in hidden[1:-1]] + [d_out_store]

    # ---- pad + bf16-cast parameters wrapper-side ----------------------------
    w_dtype = jnp.bfloat16 if mxu_bf16 else jnp.float32
    padded_params = []
    idx = 0
    for i in range(num_layers):
        w, b = params[idx], params[idx + 1]
        idx += 2
        in_t, out_t = hidden[i], hidden[i + 1]
        in_p, out_p = feat[i], feat[i + 1]
        w = jnp.pad(w, ((0, in_p - in_t), (0, out_p - out_t))).astype(w_dtype)
        b = jnp.pad(b, ((0, 0), (0, out_p - out_t))).astype(jnp.float32)
        padded_params.extend([w, b])
        if i < num_layers - 1 and norm:
            g, be = params[idx], params[idx + 1]
            idx += 2
            g = jnp.pad(g, ((0, 0), (0, out_p - out_t))).astype(jnp.float32)
            be = jnp.pad(be, ((0, 0), (0, out_p - out_t))).astype(jnp.float32)
            padded_params.extend([g, be])

    # ---- VMEM-driven batch tile ---------------------------------------------
    budget = _vmem_budget_bytes()
    param_bytes = sum(int(p.size) * p.dtype.itemsize for p in padded_params)
    max_w = max(feat)
    # double-buffered input + output blocks, plus ~6 live f32 intermediates
    bytes_per_row = 4 * (2 * d_in + 2 * d_out_store + 6 * max_w)
    avail = budget - 2 * param_bytes - (2 << 20)
    max_tile = max(8, (avail // bytes_per_row) // 8 * 8) if avail > 0 else 8

    batch_tile = max(8, min(batch_tile, max_tile) // 8 * 8)
    batch_tile = min(batch_tile, _round_up(B, 8))   # don't over-pad tiny batches
    # Ensure >= 2 grid steps so the "parallel" axis can shard across both
    # TensorCores on v7x (negligible cost on single-TC v5e/v6e).
    if B >= 16 and _round_up(B, batch_tile) // batch_tile < 2:
        batch_tile = max(8, _round_up((B + 1) // 2, 8))
    B_pad = _round_up(B, batch_tile)
    x_p = jnp.pad(x, ((0, B_pad - B), (0, 0))) if B_pad != B else x

    kernel = _make_encoder_kernel(num_layers, norm, hidden, mxu_bf16=mxu_bf16)

    # Declared VMEM limit: sized from the tile + params (worst case double-
    # buffered), never below the actual need, capped by the per-gen budget.
    est = 2 * param_bytes + batch_tile * bytes_per_row
    vmem_limit = int(min(budget, max(16 * 2**20, 2 * est + (4 << 20))))

    flops = 2 * B_pad * sum(feat[i] * feat[i + 1] for i in range(num_layers))
    transcend = B_pad * (num_layers - 1) if norm else 0
    bytes_accessed = (int(x_p.size) * x_p.dtype.itemsize + param_bytes
                      + B_pad * d_out_store * x.dtype.itemsize)
    cost = pl.CostEstimate(flops=int(flops), transcendentals=int(transcend),
                           bytes_accessed=int(bytes_accessed))

    def _call(single_buffer_params):
        if single_buffer_params:
            # Constant index_map => keep ONE resident copy of each weight/bias
            # instead of the default double buffer (decisive at 1-2K widths).
            param_specs = [
                pl.BlockSpec(p.shape, lambda i, nd=p.ndim: (0,) * nd,
                             pipeline_mode=pl.Buffered(1))
                for p in padded_params
            ]
        else:
            param_specs = [
                pl.BlockSpec(p.shape, lambda i, nd=p.ndim: (0,) * nd)
                for p in padded_params
            ]
        return pl.pallas_call(
            kernel,
            out_shape=jax.ShapeDtypeStruct((B_pad, d_out_store), x.dtype),
            grid_spec=pl.GridSpec(
                grid=(B_pad // batch_tile,),
                in_specs=[pl.BlockSpec((batch_tile, d_in), lambda i: (i, 0))]
                + param_specs,
                out_specs=pl.BlockSpec((batch_tile, d_out_store),
                                       lambda i: (i, 0)),
            ),
            compiler_params=pltpu.CompilerParams(
                dimension_semantics=("parallel",),
                vmem_limit_bytes=vmem_limit,
            ),
            cost_estimate=cost,
        )(x_p, *padded_params)

    try:
        out = _call(single_buffer_params=hasattr(pl, "Buffered"))
    except Exception:
        out = _call(single_buffer_params=False)   # fallback: default buffering

    return out[:B, :d_out]


def init_encoder_params(key, hidden, norm):
    """Deterministic synthetic init matching the nn.Module parameter shapes."""
    params = []
    num_layers = len(hidden) - 1
    for i in range(num_layers):
        fan_in, fan_out = hidden[i], hidden[i + 1]
        key, kw, kb = jax.random.split(key, 3)
        bound = 1.0 / jnp.sqrt(fan_in)
        # PyTorch Linear stores weight as (out, in); we keep the transposed
        # (in, out) layout for the kernel's row-major matmul.
        w = jax.random.uniform(kw, (fan_in, fan_out), jnp.float32, -bound, bound)
        b = jax.random.uniform(kb, (1, fan_out), jnp.float32, -bound, bound)
        params.extend([w, b])
        if i < num_layers - 1 and norm:
            params.extend([jnp.ones((1, fan_out), jnp.float32),
                           jnp.zeros((1, fan_out), jnp.float32)])
    return params


def encoder_reference(x, params, *, hidden, norm, eps=1e-5):
    """Pure-JAX reference (eval mode) for validation."""
    num_layers = len(hidden) - 1
    h = x
    idx = 0
    for i in range(num_layers):
        w, b = params[idx], params[idx + 1]
        idx += 2
        h = jnp.dot(h, w, precision=jax.lax.Precision.HIGHEST) + b
        if i < num_layers - 1:
            if norm:
                g, be = params[idx], params[idx + 1]
                idx += 2
                mu = jnp.mean(h, axis=-1, keepdims=True)
                var = jnp.mean((h - mu) ** 2, axis=-1, keepdims=True)
                h = (h - mu) * jax.lax.rsqrt(var + eps) * g + be
            h = jnp.maximum(h, 0.0)
    return h


if __name__ == "__main__":
    # Module hyperparameters (small, consistent with Encoder(hidden, dropout, norm)).
    hidden = [32, 64, 48, 16]
    dropout = 0.1          # eval-mode => identity
    norm = True

    key = jax.random.PRNGKey(0)
    key, kx = jax.random.split(key)
    B = 16
    x = jax.random.normal(kx, (B, hidden[0]), jnp.float32)
    params = init_encoder_params(jax.random.PRNGKey(0), hidden, norm)
    ref = encoder_reference(x, params, hidden=hidden, norm=norm)

    # Default path: bf16 MXU operands, f32 elementwise math.
    out = jax.block_until_ready(
        encoder_forward(x, params, hidden=hidden, norm=norm))
    assert out.shape == (B, hidden[-1])
    assert jnp.allclose(out, ref, atol=2e-2, rtol=2e-2), "mismatch vs reference"

    # Ragged batch (not a multiple of 8 / of the tile).
    B2 = 13
    x2 = jax.random.normal(jax.random.PRNGKey(7), (B2, hidden[0]), jnp.float32)
    out2 = jax.block_until_ready(
        encoder_forward(x2, params, hidden=hidden, norm=norm))
    ref2 = encoder_reference(x2, params, hidden=hidden, norm=norm)
    assert out2.shape == (B2, hidden[-1])
    assert jnp.allclose(out2, ref2, atol=2e-2, rtol=2e-2), "mismatch (ragged B)"

    # norm=False branch, full-f32 matmul path.
    params_nn = init_encoder_params(jax.random.PRNGKey(1), hidden, False)
    out3 = jax.block_until_ready(
        encoder_forward(x, params_nn, hidden=hidden, norm=False, mxu_bf16=False))
    ref3 = encoder_reference(x, params_nn, hidden=hidden, norm=False)
    assert jnp.allclose(out3, ref3, atol=2e-2, rtol=2e-2), "mismatch (no norm)"

    print("KERNEL_OK")
</pallas_src>

<mosaic_0001>
module attributes {stable_mosaic.version = 11 : i64} {
  func.func @kernel(%arg0: i32, %arg1: memref<8x32xf32, #tpu.memory_space<vmem>>, %arg2: memref<32x128xbf16, #tpu.memory_space<vmem>>, %arg3: memref<1x128xf32, #tpu.memory_space<vmem>>, %arg4: memref<1x128xf32, #tpu.memory_space<vmem>>, %arg5: memref<1x128xf32, #tpu.memory_space<vmem>>, %arg6: memref<128x128xbf16, #tpu.memory_space<vmem>>, %arg7: memref<1x128xf32, #tpu.memory_space<vmem>>, %arg8: memref<1x128xf32, #tpu.memory_space<vmem>>, %arg9: memref<1x128xf32, #tpu.memory_space<vmem>>, %arg10: memref<128x16xbf16, #tpu.memory_space<vmem>>, %arg11: memref<1x16xf32, #tpu.memory_space<vmem>>, %arg12: memref<8x16xf32, #tpu.memory_space<vmem>>) attributes {dimension_semantics = [#tpu.dimension_semantics<parallel>], iteration_bounds = array<i64: 2>, scalar_prefetch = 0 : i64, scratch_operands = 0 : i64, tpu.core_type = #tpu.core_type<tc>, window_params = [{transform_indices = @transform_0, window_bounds = array<i64: 8, 32>}, {pipeline_mode = #tpu.pipeline_mode<synchronous>, transform_indices = @transform_1, window_bounds = array<i64: 32, 128>}, {pipeline_mode = #tpu.pipeline_mode<synchronous>, transform_indices = @transform_2, window_bounds = array<i64: 1, 128>}, {pipeline_mode = #tpu.pipeline_mode<synchronous>, transform_indices = @transform_3, window_bounds = array<i64: 1, 128>}, {pipeline_mode = #tpu.pipeline_mode<synchronous>, transform_indices = @transform_4, window_bounds = array<i64: 1, 128>}, {pipeline_mode = #tpu.pipeline_mode<synchronous>, transform_indices = @transform_5, window_bounds = array<i64: 128, 128>}, {pipeline_mode = #tpu.pipeline_mode<synchronous>, transform_indices = @transform_6, window_bounds = array<i64: 1, 128>}, {pipeline_mode = #tpu.pipeline_mode<synchronous>, transform_indices = @transform_7, window_bounds = array<i64: 1, 128>}, {pipeline_mode = #tpu.pipeline_mode<synchronous>, transform_indices = @transform_8, window_bounds = array<i64: 1, 128>}, {pipeline_mode = #tpu.pipeline_mode<synchronous>, transform_indices = @transform_9, window_bounds = array<i64: 128, 16>}, {pipeline_mode = #tpu.pipeline_mode<synchronous>, transform_indices = @transform_10, window_bounds = array<i64: 1, 16>}, {transform_indices = @transform_11, window_bounds = array<i64: 8, 16>}]} {
    %c0 = arith.constant 0 : index
    %c0_0 = arith.constant 0 : index
    %0 = vector.load %arg1[%c0, %c0_0] : memref<8x32xf32, #tpu.memory_space<vmem>>, vector<8x32xf32>
    %c0_1 = arith.constant 0 : index
    %c0_2 = arith.constant 0 : index
    %1 = vector.load %arg2[%c0_1, %c0_2] : memref<32x128xbf16, #tpu.memory_space<vmem>>, vector<32x128xbf16>
    %c0_3 = arith.constant 0 : index
    %c0_4 = arith.constant 0 : index
    %2 = vector.load %arg3[%c0_3, %c0_4] : memref<1x128xf32, #tpu.memory_space<vmem>>, vector<1x128xf32>
    %3 = arith.truncf %0 : vector<8x32xf32> to vector<8x32xbf16>
    %cst = arith.constant dense<0.000000e+00> : vector<8x128xf32>
    %4 = tpu.matmul %3, %1, %cst {dimension_numbers = #tpu.dot_dimension_numbers<[1], [0], [0], [1], [0, 0, 1, 1], [], []>} : vector<8x32xbf16>, vector<32x128xbf16>, vector<8x128xf32> -> vector<8x128xf32>
    %5 = vector.broadcast %2 : vector<1x128xf32> to vector<8x128xf32>
    %6 = arith.addf %4, %5 : vector<8x128xf32>
    %c0_5 = arith.constant 0 : index
    %c0_6 = arith.constant 0 : index
    %7 = vector.load %arg4[%c0_5, %c0_6] : memref<1x128xf32, #tpu.memory_space<vmem>>, vector<1x128xf32>
    %c0_7 = arith.constant 0 : index
    %c0_8 = arith.constant 0 : index
    %8 = vector.load %arg5[%c0_7, %c0_8] : memref<1x128xf32, #tpu.memory_space<vmem>>, vector<1x128xf32>
    %cst_9 = arith.constant dense<0.000000e+00> : vector<8xf32>
    %9 = vector.multi_reduction <add>, %6, %cst_9 [1] : vector<8x128xf32> to vector<8xf32>
    %10 = vector.shape_cast %9 : vector<8xf32> to vector<8x1xf32>
    %cst_10 = arith.constant 1.562500e-02 : f32
    %11 = vector.broadcast %cst_10 : f32 to vector<8x1xf32>
    %12 = arith.mulf %10, %11 : vector<8x1xf32>
    %13 = vector.broadcast %12 : vector<8x1xf32> to vector<8x128xf32>
    %14 = arith.subf %6, %13 : vector<8x128xf32>
    %15 = tpu.iota {dimensions = array<i32: 1>} : vector<8x128xi32>
    %c64_i32 = arith.constant 64 : i32
    %16 = vector.broadcast %c64_i32 : i32 to vector<8x128xi32>
    %17 = arith.cmpi slt, %15, %16 : vector<8x128xi32>
    %cst_11 = arith.constant 0.000000e+00 : f32
    %18 = vector.broadcast %cst_11 : f32 to vector<8x128xf32>
    %19 = arith.select %17, %14, %18 : vector<8x128xi1>, vector<8x128xf32>
    %20 = arith.mulf %19, %19 : vector<8x128xf32>
    %cst_12 = arith.constant dense<0.000000e+00> : vector<8xf32>
    %21 = vector.multi_reduction <add>, %20, %cst_12 [1] : vector<8x128xf32> to vector<8xf32>
    %22 = vector.shape_cast %21 : vector<8xf32> to vector<8x1xf32>
    %cst_13 = arith.constant 1.562500e-02 : f32
    %23 = vector.broadcast %cst_13 : f32 to vector<8x1xf32>
    %24 = arith.mulf %22, %23 : vector<8x1xf32>
    %cst_14 = arith.constant 9.99999974E-6 : f32
    %25 = vector.broadcast %cst_14 : f32 to vector<8x1xf32>
    %26 = arith.addf %24, %25 : vector<8x1xf32>
    %27 = math.rsqrt %26 : vector<8x1xf32>
    %28 = vector.broadcast %27 : vector<8x1xf32> to vector<8x128xf32>
    %29 = arith.mulf %19, %28 : vector<8x128xf32>
    %30 = vector.broadcast %7 : vector<1x128xf32> to vector<8x128xf32>
    %31 = arith.mulf %29, %30 : vector<8x128xf32>
    %32 = vector.broadcast %8 : vector<1x128xf32> to vector<8x128xf32>
    %33 = arith.addf %31, %32 : vector<8x128xf32>
    %cst_15 = arith.constant 0.000000e+00 : f32
    %34 = vector.broadcast %cst_15 : f32 to vector<8x128xf32>
    %35 = arith.maximumf %33, %34 : vector<8x128xf32>
    %c0_16 = arith.constant 0 : index
    %c0_17 = arith.constant 0 : index
    %36 = vector.load %arg6[%c0_16, %c0_17] : memref<128x128xbf16, #tpu.memory_space<vmem>>, vector<128x128xbf16>
    %c0_18 = arith.constant 0 : index
    %c0_19 = arith.constant 0 : index
    %37 = vector.load %arg7[%c0_18, %c0_19] : memref<1x128xf32, #tpu.memory_space<vmem>>, vector<1x128xf32>
    %38 = arith.truncf %35 : vector<8x128xf32> to vector<8x128xbf16>
    %cst_20 = arith.constant dense<0.000000e+00> : vector<8x128xf32>
    %39 = tpu.matmul %38, %36, %cst_20 {dimension_numbers = #tpu.dot_dimension_numbers<[1], [0], [0], [1], [0, 0, 1, 1], [], []>} : vector<8x128xbf16>, vector<128x128xbf16>, vector<8x128xf32> -> vector<8x128xf32>
    %40 = vector.broadcast %37 : vector<1x128xf32> to vector<8x128xf32>
    %41 = arith.addf %39, %40 : vector<8x128xf32>
    %c0_21 = arith.constant 0 : index
    %c0_22 = arith.constant 0 : index
    %42 = vector.load %arg8[%c0_21, %c0_22] : memref<1x128xf32, #tpu.memory_space<vmem>>, vector<1x128xf32>
    %c0_23 = arith.constant 0 : index
    %c0_24 = arith.constant 0 : index
    %43 = vector.load %arg9[%c0_23, %c0_24] : memref<1x128xf32, #tpu.memory_space<vmem>>, vector<1x128xf32>
    %cst_25 = arith.constant dense<0.000000e+00> : vector<8xf32>
    %44 = vector.multi_reduction <add>, %41, %cst_25 [1] : vector<8x128xf32> to vector<8xf32>
    %45 = vector.shape_cast %44 : vector<8xf32> to vector<8x1xf32>
    %cst_26 = arith.constant 0.020833334 : f32
    %46 = vector.broadcast %cst_26 : f32 to vector<8x1xf32>
    %47 = arith.mulf %45, %46 : vector<8x1xf32>
    %48 = vector.broadcast %47 : vector<8x1xf32> to vector<8x128xf32>
    %49 = arith.subf %41, %48 : vector<8x128xf32>
    %50 = tpu.iota {dimensions = array<i32: 1>} : vector<8x128xi32>
    %c48_i32 = arith.constant 48 : i32
    %51 = vector.broadcast %c48_i32 : i32 to vector<8x128xi32>
    %52 = arith.cmpi slt, %50, %51 : vector<8x128xi32>
    %cst_27 = arith.constant 0.000000e+00 : f32
    %53 = vector.broadcast %cst_27 : f32 to vector<8x128xf32>
    %54 = arith.select %52, %49, %53 : vector<8x128xi1>, vector<8x128xf32>
    %55 = arith.mulf %54, %54 : vector<8x128xf32>
    %cst_28 = arith.constant dense<0.000000e+00> : vector<8xf32>
    %56 = vector.multi_reduction <add>, %55, %cst_28 [1] : vector<8x128xf32> to vector<8xf32>
    %57 = vector.shape_cast %56 : vector<8xf32> to vector<8x1xf32>
    %cst_29 = arith.constant 0.020833334 : f32
    %58 = vector.broadcast %cst_29 : f32 to vector<8x1xf32>
    %59 = arith.mulf %57, %58 : vector<8x1xf32>
    %cst_30 = arith.constant 9.99999974E-6 : f32
    %60 = vector.broadcast %cst_30 : f32 to vector<8x1xf32>
    %61 = arith.addf %59, %60 : vector<8x1xf32>
    %62 = math.rsqrt %61 : vector<8x1xf32>
    %63 = vector.broadcast %62 : vector<8x1xf32> to vector<8x128xf32>
    %64 = arith.mulf %54, %63 : vector<8x128xf32>
    %65 = vector.broadcast %42 : vector<1x128xf32> to vector<8x128xf32>
    %66 = arith.mulf %64, %65 : vector<8x128xf32>
    %67 = vector.broadcast %43 : vector<1x128xf32> to vector<8x128xf32>
    %68 = arith.addf %66, %67 : vector<8x128xf32>
    %cst_31 = arith.constant 0.000000e+00 : f32
    %69 = vector.broadcast %cst_31 : f32 to vector<8x128xf32>
    %70 = arith.maximumf %68, %69 : vector<8x128xf32>
    %c0_32 = arith.constant 0 : index
    %c0_33 = arith.constant 0 : index
    %71 = vector.load %arg10[%c0_32, %c0_33] : memref<128x16xbf16, #tpu.memory_space<vmem>>, vector<128x16xbf16>
    %c0_34 = arith.constant 0 : index
    %c0_35 = arith.constant 0 : index
    %72 = vector.load %arg11[%c0_34, %c0_35] : memref<1x16xf32, #tpu.memory_space<vmem>>, vector<1x16xf32>
    %73 = arith.truncf %70 : vector<8x128xf32> to vector<8x128xbf16>
    %cst_36 = arith.constant dense<0.000000e+00> : vector<8x16xf32>
    %74 = tpu.matmul %73, %71, %cst_36 {dimension_numbers = #tpu.dot_dimension_numbers<[1], [0], [0], [1], [0, 0, 1, 1], [], []>} : vector<8x128xbf16>, vector<128x16xbf16>, vector<8x16xf32> -> vector<8x16xf32>
    %75 = vector.broadcast %72 : vector<1x16xf32> to vector<8x16xf32>
    %76 = arith.addf %74, %75 : vector<8x16xf32>
    %c0_37 = arith.constant 0 : index
    %c0_38 = arith.constant 0 : index
    %77 = vector.load %arg12[%c0_37, %c0_38] : memref<8x16xf32, #tpu.memory_space<vmem>>, vector<8x16xf32>
    tpu.vector_store %arg12[%c0_37, %c0_38], %76 {strides = array<i32>} : memref<8x16xf32, #tpu.memory_space<vmem>>, vector<8x16xf32>,
    return
  }
  func.func @transform_0(%arg0: i32) -> (i32, i32) {
    %c0_i32 = arith.constant 0 : i32
    %c0_i32_0 = arith.constant 0 : i32
    return %arg0, %c0_i32 : i32, i32
  }
  func.func @transform_1(%arg0: i32) -> (i32, i32) {
    %c0_i32 = arith.constant 0 : i32
    %c0_i32_0 = arith.constant 0 : i32
    %c0_i32_1 = arith.constant 0 : i32
    return %c0_i32, %c0_i32_0 : i32, i32
  }
  func.func @transform_2(%arg0: i32) -> (i32, i32) {
    %c0_i32 = arith.constant 0 : i32
    %c0_i32_0 = arith.constant 0 : i32
    %c0_i32_1 = arith.constant 0 : i32
    return %c0_i32, %c0_i32_0 : i32, i32
  }
  func.func @transform_3(%arg0: i32) -> (i32, i32) {
    %c0_i32 = arith.constant 0 : i32
    %c0_i32_0 = arith.constant 0 : i32
    %c0_i32_1 = arith.constant 0 : i32
    return %c0_i32, %c0_i32_0 : i32, i32
  }
  func.func @transform_4(%arg0: i32) -> (i32, i32) {
    %c0_i32 = arith.constant 0 : i32
    %c0_i32_0 = arith.constant 0 : i32
    %c0_i32_1 = arith.constant 0 : i32
    return %c0_i32, %c0_i32_0 : i32, i32
  }
  func.func @transform_5(%arg0: i32) -> (i32, i32) {
    %c0_i32 = arith.constant 0 : i32
    %c0_i32_0 = arith.constant 0 : i32
    %c0_i32_1 = arith.constant 0 : i32
    return %c0_i32, %c0_i32_0 : i32, i32
  }
  func.func @transform_6(%arg0: i32) -> (i32, i32) {
    %c0_i32 = arith.constant 0 : i32
    %c0_i32_0 = arith.constant 0 : i32
    %c0_i32_1 = arith.constant 0 : i32
    return %c0_i32, %c0_i32_0 : i32, i32
  }
  func.func @transform_7(%arg0: i32) -> (i32, i32) {
    %c0_i32 = arith.constant 0 : i32
    %c0_i32_0 = arith.constant 0 : i32
    %c0_i32_1 = arith.constant 0 : i32
    return %c0_i32, %c0_i32_0 : i32, i32
  }
  func.func @transform_8(%arg0: i32) -> (i32, i32) {
    %c0_i32 = arith.constant 0 : i32
    %c0_i32_0 = arith.constant 0 : i32
    %c0_i32_1 = arith.constant 0 : i32
    return %c0_i32, %c0_i32_0 : i32, i32
  }
  func.func @transform_9(%arg0: i32) -> (i32, i32) {
    %c0_i32 = arith.constant 0 : i32
    %c0_i32_0 = arith.constant 0 : i32
    %c0_i32_1 = arith.constant 0 : i32
    return %c0_i32, %c0_i32_0 : i32, i32
  }
  func.func @transform_10(%arg0: i32) -> (i32, i32) {
    %c0_i32 = arith.constant 0 : i32
    %c0_i32_0 = arith.constant 0 : i32
    %c0_i32_1 = arith.constant 0 : i32
    return %c0_i32, %c0_i32_0 : i32, i32
  }
  func.func @transform_11(%arg0: i32) -> (i32, i32) {
    %c0_i32 = arith.constant 0 : i32
    %c0_i32_0 = arith.constant 0 : i32
    return %arg0, %c0_i32 : i32, i32
  }
}

module attributes {stable_mosaic.version = 11 : i64} {
  func.func @kernel(%arg0: i32, %arg1: memref<8x32xf32, #tpu.memory_space<vmem>>, %arg2: memref<32x128xbf16, #tpu.memory_space<vmem>>, %arg3: memref<1x128xf32, #tpu.memory_space<vmem>>, %arg4: memref<1x128xf32, #tpu.memory_space<vmem>>, %arg5: memref<1x128xf32, #tpu.memory_space<vmem>>, %arg6: memref<128x128xbf16, #tpu.memory_space<vmem>>, %arg7: memref<1x128xf32, #tpu.memory_space<vmem>>, %arg8: memref<1x128xf32, #tpu.memory_space<vmem>>, %arg9: memref<1x128xf32, #tpu.memory_space<vmem>>, %arg10: memref<128x16xbf16, #tpu.memory_space<vmem>>, %arg11: memref<1x16xf32, #tpu.memory_space<vmem>>, %arg12: memref<8x16xf32, #tpu.memory_space<vmem>>) attributes {dimension_semantics = [#tpu.dimension_semantics<parallel>], iteration_bounds = array<i64: 2>, scalar_prefetch = 0 : i64, scratch_operands = 0 : i64, tpu.core_type = #tpu.core_type<tc>, window_params = [{transform_indices = @transform_0, window_bounds = array<i64: 8, 32>}, {pipeline_mode = #tpu.pipeline_mode<synchronous>, transform_indices = @transform_1, window_bounds = array<i64: 32, 128>}, {pipeline_mode = #tpu.pipeline_mode<synchronous>, transform_indices = @transform_2, window_bounds = array<i64: 1, 128>}, {pipeline_mode = #tpu.pipeline_mode<synchronous>, transform_indices = @transform_3, window_bounds = array<i64: 1, 128>}, {pipeline_mode = #tpu.pipeline_mode<synchronous>, transform_indices = @transform_4, window_bounds = array<i64: 1, 128>}, {pipeline_mode = #tpu.pipeline_mode<synchronous>, transform_indices = @transform_5, window_bounds = array<i64: 128, 128>}, {pipeline_mode = #tpu.pipeline_mode<synchronous>, transform_indices = @transform_6, window_bounds = array<i64: 1, 128>}, {pipeline_mode = #tpu.pipeline_mode<synchronous>, transform_indices = @transform_7, window_bounds = array<i64: 1, 128>}, {pipeline_mode = #tpu.pipeline_mode<synchronous>, transform_indices = @transform_8, window_bounds = array<i64: 1, 128>}, {pipeline_mode = #tpu.pipeline_mode<synchronous>, transform_indices = @transform_9, window_bounds = array<i64: 128, 16>}, {pipeline_mode = #tpu.pipeline_mode<synchronous>, transform_indices = @transform_10, window_bounds = array<i64: 1, 16>}, {transform_indices = @transform_11, window_bounds = array<i64: 8, 16>}]} {
    %c0 = arith.constant 0 : index
    %c0_0 = arith.constant 0 : index
    %0 = vector.load %arg1[%c0, %c0_0] : memref<8x32xf32, #tpu.memory_space<vmem>>, vector<8x32xf32>
    %c0_1 = arith.constant 0 : index
    %c0_2 = arith.constant 0 : index
    %1 = vector.load %arg2[%c0_1, %c0_2] : memref<32x128xbf16, #tpu.memory_space<vmem>>, vector<32x128xbf16>
    %c0_3 = arith.constant 0 : index
    %c0_4 = arith.constant 0 : index
    %2 = vector.load %arg3[%c0_3, %c0_4] : memref<1x128xf32, #tpu.memory_space<vmem>>, vector<1x128xf32>
    %3 = arith.truncf %0 : vector<8x32xf32> to vector<8x32xbf16>
    %cst = arith.constant dense<0.000000e+00> : vector<8x128xf32>
    %4 = tpu.matmul %3, %1, %cst {dimension_numbers = #tpu.dot_dimension_numbers<[1], [0], [0], [1], [0, 0, 1, 1], [], []>} : vector<8x32xbf16>, vector<32x128xbf16>, vector<8x128xf32> -> vector<8x128xf32>
    %5 = vector.broadcast %2 : vector<1x128xf32> to vector<8x128xf32>
    %6 = arith.addf %4, %5 : vector<8x128xf32>
    %c0_5 = arith.constant 0 : index
    %c0_6 = arith.constant 0 : index
    %7 = vector.load %arg4[%c0_5, %c0_6] : memref<1x128xf32, #tpu.memory_space<vmem>>, vector<1x128xf32>
    %c0_7 = arith.constant 0 : index
    %c0_8 = arith.constant 0 : index
    %8 = vector.load %arg5[%c0_7, %c0_8] : memref<1x128xf32, #tpu.memory_space<vmem>>, vector<1x128xf32>
    %cst_9 = arith.constant dense<0.000000e+00> : vector<8xf32>
    %9 = vector.multi_reduction <add>, %6, %cst_9 [1] : vector<8x128xf32> to vector<8xf32>
    %10 = vector.shape_cast %9 : vector<8xf32> to vector<8x1xf32>
    %cst_10 = arith.constant 1.562500e-02 : f32
    %11 = vector.broadcast %cst_10 : f32 to vector<8x1xf32>
    %12 = arith.mulf %10, %11 : vector<8x1xf32>
    %13 = vector.broadcast %12 : vector<8x1xf32> to vector<8x128xf32>
    %14 = arith.subf %6, %13 : vector<8x128xf32>
    %15 = tpu.iota {dimensions = array<i32: 1>} : vector<8x128xi32>
    %c64_i32 = arith.constant 64 : i32
    %16 = vector.broadcast %c64_i32 : i32 to vector<8x128xi32>
    %17 = arith.cmpi slt, %15, %16 : vector<8x128xi32>
    %cst_11 = arith.constant 0.000000e+00 : f32
    %18 = vector.broadcast %cst_11 : f32 to vector<8x128xf32>
    %19 = arith.select %17, %14, %18 : vector<8x128xi1>, vector<8x128xf32>
    %20 = arith.mulf %19, %19 : vector<8x128xf32>
    %cst_12 = arith.constant dense<0.000000e+00> : vector<8xf32>
    %21 = vector.multi_reduction <add>, %20, %cst_12 [1] : vector<8x128xf32> to vector<8xf32>
    %22 = vector.shape_cast %21 : vector<8xf32> to vector<8x1xf32>
    %cst_13 = arith.constant 1.562500e-02 : f32
    %23 = vector.broadcast %cst_13 : f32 to vector<8x1xf32>
    %24 = arith.mulf %22, %23 : vector<8x1xf32>
    %cst_14 = arith.constant 9.99999974E-6 : f32
    %25 = vector.broadcast %cst_14 : f32 to vector<8x1xf32>
    %26 = arith.addf %24, %25 : vector<8x1xf32>
    %27 = math.rsqrt %26 : vector<8x1xf32>
    %28 = vector.broadcast %27 : vector<8x1xf32> to vector<8x128xf32>
    %29 = arith.mulf %19, %28 : vector<8x128xf32>
    %30 = vector.broadcast %7 : vector<1x128xf32> to vector<8x128xf32>
    %31 = arith.mulf %29, %30 : vector<8x128xf32>
    %32 = vector.broadcast %8 : vector<1x128xf32> to vector<8x128xf32>
    %33 = arith.addf %31, %32 : vector<8x128xf32>
    %cst_15 = arith.constant 0.000000e+00 : f32
    %34 = vector.broadcast %cst_15 : f32 to vector<8x128xf32>
    %35 = arith.maximumf %33, %34 : vector<8x128xf32>
    %c0_16 = arith.constant 0 : index
    %c0_17 = arith.constant 0 : index
    %36 = vector.load %arg6[%c0_16, %c0_17] : memref<128x128xbf16, #tpu.memory_space<vmem>>, vector<128x128xbf16>
    %c0_18 = arith.constant 0 : index
    %c0_19 = arith.constant 0 : index
    %37 = vector.load %arg7[%c0_18, %c0_19] : memref<1x128xf32, #tpu.memory_space<vmem>>, vector<1x128xf32>
    %38 = arith.truncf %35 : vector<8x128xf32> to vector<8x128xbf16>
    %cst_20 = arith.constant dense<0.000000e+00> : vector<8x128xf32>
    %39 = tpu.matmul %38, %36, %cst_20 {dimension_numbers = #tpu.dot_dimension_numbers<[1], [0], [0], [1], [0, 0, 1, 1], [], []>} : vector<8x128xbf16>, vector<128x128xbf16>, vector<8x128xf32> -> vector<8x128xf32>
    %40 = vector.broadcast %37 : vector<1x128xf32> to vector<8x128xf32>
    %41 = arith.addf %39, %40 : vector<8x128xf32>
    %c0_21 = arith.constant 0 : index
    %c0_22 = arith.constant 0 : index
    %42 = vector.load %arg8[%c0_21, %c0_22] : memref<1x128xf32, #tpu.memory_space<vmem>>, vector<1x128xf32>
    %c0_23 = arith.constant 0 : index
    %c0_24 = arith.constant 0 : index
    %43 = vector.load %arg9[%c0_23, %c0_24] : memref<1x128xf32, #tpu.memory_space<vmem>>, vector<1x128xf32>
    %cst_25 = arith.constant dense<0.000000e+00> : vector<8xf32>
    %44 = vector.multi_reduction <add>, %41, %cst_25 [1] : vector<8x128xf32> to vector<8xf32>
    %45 = vector.shape_cast %44 : vector<8xf32> to vector<8x1xf32>
    %cst_26 = arith.constant 0.020833334 : f32
    %46 = vector.broadcast %cst_26 : f32 to vector<8x1xf32>
    %47 = arith.mulf %45, %46 : vector<8x1xf32>
    %48 = vector.broadcast %47 : vector<8x1xf32> to vector<8x128xf32>
    %49 = arith.subf %41, %48 : vector<8x128xf32>
    %50 = tpu.iota {dimensions = array<i32: 1>} : vector<8x128xi32>
    %c48_i32 = arith.constant 48 : i32
    %51 = vector.broadcast %c48_i32 : i32 to vector<8x128xi32>
    %52 = arith.cmpi slt, %50, %51 : vector<8x128xi32>
    %cst_27 = arith.constant 0.000000e+00 : f32
    %53 = vector.broadcast %cst_27 : f32 to vector<8x128xf32>
    %54 = arith.select %52, %49, %53 : vector<8x128xi1>, vector<8x128xf32>
    %55 = arith.mulf %54, %54 : vector<8x128xf32>
    %cst_28 = arith.constant dense<0.000000e+00> : vector<8xf32>
    %56 = vector.multi_reduction <add>, %55, %cst_28 [1] : vector<8x128xf32> to vector<8xf32>
    %57 = vector.shape_cast %56 : vector<8xf32> to vector<8x1xf32>
    %cst_29 = arith.constant 0.020833334 : f32
    %58 = vector.broadcast %cst_29 : f32 to vector<8x1xf32>
    %59 = arith.mulf %57, %58 : vector<8x1xf32>
    %cst_30 = arith.constant 9.99999974E-6 : f32
    %60 = vector.broadcast %cst_30 : f32 to vector<8x1xf32>
    %61 = arith.addf %59, %60 : vector<8x1xf32>
    %62 = math.rsqrt %61 : vector<8x1xf32>
    %63 = vector.broadcast %62 : vector<8x1xf32> to vector<8x128xf32>
    %64 = arith.mulf %54, %63 : vector<8x128xf32>
    %65 = vector.broadcast %42 : vector<1x128xf32> to vector<8x128xf32>
    %66 = arith.mulf %64, %65 : vector<8x128xf32>
    %67 = vector.broadcast %43 : vector<1x128xf32> to vector<8x128xf32>
    %68 = arith.addf %66, %67 : vector<8x128xf32>
    %cst_31 = arith.constant 0.000000e+00 : f32
    %69 = vector.broadcast %cst_31 : f32 to vector<8x128xf32>
    %70 = arith.maximumf %68, %69 : vector<8x128xf32>
    %c0_32 = arith.constant 0 : index
    %c0_33 = arith.constant 0 : index
    %71 = vector.load %arg10[%c0_32, %c0_33] : memref<128x16xbf16, #tpu.memory_space<vmem>>, vector<128x16xbf16>
    %c0_34 = arith.constant 0 : index
    %c0_35 = arith.constant 0 : index
    %72 = vector.load %arg11[%c0_34, %c0_35] : memref<1x16xf32, #tpu.memory_space<vmem>>, vector<1x16xf32>
    %73 = arith.truncf %70 : vector<8x128xf32> to vector<8x128xbf16>
    %cst_36 = arith.constant dense<0.000000e+00> : vector<8x16xf32>
    %74 = tpu.matmul %73, %71, %cst_36 {dimension_numbers = #tpu.dot_dimension_numbers<[1], [0], [0], [1], [0, 0, 1, 1], [], []>} : vector<8x128xbf16>, vector<128x16xbf16>, vector<8x16xf32> -> vector<8x16xf32>
    %75 = vector.broadcast %72 : vector<1x16xf32> to vector<8x16xf32>
    %76 = arith.addf %74, %75 : vector<8x16xf32>
    %c0_37 = arith.constant 0 : index
    %c0_38 = arith.constant 0 : index
    %77 = vector.load %arg12[%c0_37, %c0_38] : memref<8x16xf32, #tpu.memory_space<vmem>>, vector<8x16xf32>
    tpu.vector_store %arg12[%c0_37, %c0_38], %76 {strides = array<i32>} : memref<8x16xf32, #tpu.memory_space<vmem>>, vector<8x16xf32>,
    return
  }
  func.func @transform_0(%arg0: i32) -> (i32, i32) {
    %c0_i32 = arith.constant 0 : i32
    %c0_i32_0 = arith.constant 0 : i32
    return %arg0, %c0_i32 : i32, i32
  }
  func.func @transform_1(%arg0: i32) -> (i32, i32) {
    %c0_i32 = arith.constant 0 : i32
    %c0_i32_0 = arith.constant 0 : i32
    %c0_i32_1 = arith.constant 0 : i32
    return %c0_i32, %c0_i32_0 : i32, i32
  }
  func.func @transform_2(%arg0: i32) -> (i32, i32) {
    %c0_i32 = arith.constant 0 : i32
    %c0_i32_0 = arith.constant 0 : i32
    %c0_i32_1 = arith.constant 0 : i32
    return %c0_i32, %c0_i32_0 : i32, i32
  }
  func.func @transform_3(%arg0: i32) -> (i32, i32) {
    %c0_i32 = arith.constant 0 : i32
    %c0_i32_0 = arith.constant 0 : i32
    %c0_i32_1 = arith.constant 0 : i32
    return %c0_i32, %c0_i32_0 : i32, i32
  }
  func.func @transform_4(%arg0: i32) -> (i32, i32) {
    %c0_i32 = arith.constant 0 : i32
    %c0_i32_0 = arith.constant 0 : i32
    %c0_i32_1 = arith.constant 0 : i32
    return %c0_i32, %c0_i32_0 : i32, i32
  }
  func.func @transform_5(%arg0: i32) -> (i32, i32) {
    %c0_i32 = arith.constant 0 : i32
    %c0_i32_0 = arith.constant 0 : i32
    %c0_i32_1 = arith.constant 0 : i32
    return %c0_i32, %c0_i32_0 : i32, i32
  }
  func.func @transform_6(%arg0: i32) -> (i32, i32) {
    %c0_i32 = arith.constant 0 : i32
    %c0_i32_0 = arith.constant 0 : i32
    %c0_i32_1 = arith.constant 0 : i32
    return %c0_i32, %c0_i32_0 : i32, i32
  }
  func.func @transform_7(%arg0: i32) -> (i32, i32) {
    %c0_i32 = arith.constant 0 : i32
    %c0_i32_0 = arith.constant 0 : i32
    %c0_i32_1 = arith.constant 0 : i32
    return %c0_i32, %c0_i32_0 : i32, i32
  }
  func.func @transform_8(%arg0: i32) -> (i32, i32) {
    %c0_i32 = arith.constant 0 : i32
    %c0_i32_0 = arith.constant 0 : i32
    %c0_i32_1 = arith.constant 0 : i32
    return %c0_i32, %c0_i32_0 : i32, i32
  }
  func.func @transform_9(%arg0: i32) -> (i32, i32) {
    %c0_i32 = arith.constant 0 : i32
    %c0_i32_0 = arith.constant 0 : i32
    %c0_i32_1 = arith.constant 0 : i32
    return %c0_i32, %c0_i32_0 : i32, i32
  }
  func.func @transform_10(%arg0: i32) -> (i32, i32) {
    %c0_i32 = arith.constant 0 : i32
    %c0_i32_0 = arith.constant 0 : i32
    %c0_i32_1 = arith.constant 0 : i32
    return %c0_i32, %c0_i32_0 : i32, i32
  }
  func.func @transform_11(%arg0: i32) -> (i32, i32) {
    %c0_i32 = arith.constant 0 : i32
    %c0_i32_0 = arith.constant 0 : i32
    return %arg0, %c0_i32 : i32, i32
  }
}

</mosaic_0001>

<llo_original>
// kernel: tpu_custom_call.1
$region0: #{tpu_custom_call.1}
  #allocation0 [shape = 'u32[]', space=smem, size = 0x4, offset = 0x4, fixed_abs, tag = 'smem constant byte address 0x4 - core index']
  #allocation1 [shape = 'u32[144,128]{1,0:T(1,128)}', space=vmem, size = 0x12000, scoped, tag = 'internal scratch']
  %s0 = inlined_call_operand.vmem [shape: f32[16,32], index: 0, kind: input, shape index: {}]
  %s1 = inlined_call_operand.hbm [shape: bf16[32,128], index: 1, kind: input, shape index: {}]
  %s2 = inlined_call_operand.hbm [shape: f32[1,128], index: 2, kind: input, shape index: {}]
  %s3 = inlined_call_operand.hbm [shape: f32[1,128], index: 3, kind: input, shape index: {}]
  %s4 = inlined_call_operand.hbm [shape: f32[1,128], index: 4, kind: input, shape index: {}]
  %s5 = inlined_call_operand.vmem [shape: bf16[128,128], index: 5, kind: input, shape index: {}]
  %s6 = inlined_call_operand.hbm [shape: f32[1,128], index: 6, kind: input, shape index: {}]
  %s7 = inlined_call_operand.hbm [shape: f32[1,128], index: 7, kind: input, shape index: {}]
  %s8 = inlined_call_operand.hbm [shape: f32[1,128], index: 8, kind: input, shape index: {}]
  %s9 = inlined_call_operand.vmem [shape: bf16[128,16], index: 9, kind: input, shape index: {}]
  %s10 = inlined_call_operand.vmem [shape: f32[1,16], index: 10, kind: input, shape index: {}]
  %s11 = inlined_call_operand.hbm [shape: f32[16,16], index: 11, kind: output, shape index: {}]
  %s12 = sld [smem:[#allocation0]]
  $region105: #{tpu_custom_call.1} parent=0
    _
  %s14 = ssub.s32 1, %s12
  %s15 = scalar_select 0, %s14, %s12
  $region1: #{tpu_custom_call.1} parent=0
    #allocation2 [shape = 'u8[8192]{0}', space=vmem, size = 0x2000, scoped, tag = 'input window, operand 1, single buffered']
    #allocation3 [shape = 's32[2]{0}', space=sflag, size = 0x8, scoped, tag = 'scoped memory for tpu_custom_call.1']
    #allocation4 [shape = 's32[2]{0}', space=sflag, size = 0x8, scoped, tag = 'scoped memory for tpu_custom_call.1']
    #allocation5 [shape = 'u8[512]{0}', space=vmem, size = 0x400, scoped, tag = 'input window, operand 2, single buffered']
    #allocation6 [shape = 's32[1]{0}', space=sflag, size = 0x4, scoped, tag = 'scoped memory for tpu_custom_call.1']
    #allocation7 [shape = 'u8[512]{0}', space=vmem, size = 0x400, scoped, tag = 'input window, operand 3, single buffered']
    #allocation8 [shape = 'u8[512]{0}', space=vmem, size = 0x400, scoped, tag = 'input window, operand 4, single buffered']
    #allocation9 [shape = 's32[1]{0}', space=sflag, size = 0x4, scoped, tag = 'scoped memory for tpu_custom_call.1']
    #allocation10 [shape = 'u8[512]{0}', space=vmem, size = 0x400, scoped, tag = 'input window, operand 6, single buffered']
    #allocation11 [shape = 'u8[512]{0}', space=vmem, size = 0x400, scoped, tag = 'input window, operand 7, single buffered']
    #allocation12 [shape = 's32[1]{0}', space=sflag, size = 0x4, scoped, tag = 'scoped memory for tpu_custom_call.1']
    #allocation13 [shape = 'u8[512]{0}', space=vmem, size = 0x400, scoped, tag = 'input window, operand 8, single buffered']
    #allocation14 [shape = 'u8[8192]{0}', space=vmem, size = 0x2000, scoped, tag = 'output window, operand 0']
    %16 = vsyncpa [#allocation3], 0
    %17 = vsyncpa [#allocation6], 0
    %18 = vsyncpa [#allocation9], 0
    %19 = vsyncpa [#allocation12], 0
    %20 = vsyncpa [#allocation4], 0
    %s21 = scalar_lea.sflag [#allocation4], 1
    %22 = vsyncpa %s21, 0
    loop: start=0, step=1, limit=4
    $region2: #{tpu_custom_call.1} parent=1 // loop_pre_header
      _
    $region3: #{tpu_custom_call.1} parent=1 // loop_header
      %s24 = sphi 0, %s28
      %p25 = scmp.ge.s32.totalorder %s24, 4
      %s34 = sphi 0, %s36
      %s37 = sphi 0, %s34
      %s38 = sphi 0, %s37
      %s54 = sphi 0, %s38
      %s58 = sphi 0, %s58
      %s60 = sphi 0, %s58
      %s61 = sphi 0, %s60
      %s75 = sphi 0, %s61
      %s79 = sphi 0, %s79
      %s81 = sphi 0, %s79
      %s82 = sphi 0, %s81
      %s96 = sphi 0, %s82
      %s100 = sphi 0, %s100
      %s102 = sphi 0, %s100
      %s103 = sphi 0, %s102
      %s117 = sphi 0, %s103
      %s121 = sphi 0, %s121
      %s123 = sphi 0, %s121
      %s124 = sphi 0, %s123
      %s138 = sphi 0, %s124
      %s142 = sphi 0, %s142
      %s144 = sphi 0, %s142
      %s145 = sphi 0, %s144
      %s159 = sphi 0, %s145
      %s163 = sphi 0, %s163
      %s165 = sphi 0, %s163
      %s166 = sphi 0, %s165
      %s180 = sphi 0, %s166
      %s184 = sphi 0, %s184
      %s186 = sphi 0, %s184
      %s187 = sphi 0, %s186
      %s201 = sphi 0, %s187
      %s205 = sphi 0, %s205
      %s207 = sphi 0, %s205
      %s208 = sphi 0, %s207
      %s222 = sphi 0, %s208
      %s226 = sphi 0, %s226
      %s228 = sphi 0, %s226
      %s229 = sphi 0, %s228
      %s243 = sphi 0, %s229
      %s247 = sphi 0, %s247
      %s249 = sphi 0, %s247
      %s250 = sphi 0, %s249
      %s264 = sphi 0, %s250
      %s270 = sphi 0, %s272
      %s273 = sphi 0, %s270
      %s274 = sphi 0, %s273
      %s290 = sphi 0, %s274
    $region4: #{tpu_custom_call.1} parent=1 // loop_header_branch
      %27 = sbr.rel (%p25) target = $region8
    $region5: #{tpu_custom_call.1} parent=1 // loop_body
      %s29 = ssub.s32 %s24, 1
      %s30 = ssub.s32 %s24, 2
      %s31 = sadd.s32 %s24, 1
      %s32 = ssub.s32 %s24, %s31
      %p33 = scmp.eq.s32.totalorder %s32, 0
      %s35 = sadd.s32 %s34, 1
      %s36 = scalar_select %p33, %s34, %s35
      %p39 = pneg %p33
      %p40 = scmp.eq.s32.totalorder %s24, 1
      %p41 = por %p39, %p40
      %p42 = scmp.ne.s32.totalorder %s34, %s37
      %p43 = scmp.eq.s32.totalorder %s24, 0
      %p44 = por %p42, %p43
      %p45 = scmp.ne.s32.totalorder %s34, %s37
      %p46 = scmp.eq.s32.totalorder %s29, 1
      %p47 = por %p45, %p46
      %p48 = scmp.ne.s32.totalorder %s37, %s38
      %p49 = scmp.eq.s32.totalorder %s29, 0
      %p50 = por %p48, %p49
      %p51 = scmp.ne.s32.totalorder %s37, %s38
      %p52 = scmp.eq.s32.totalorder %s30, 1
      %p53 = por %p51, %p52
      %p55 = scmp.ne.s32.totalorder %s38, %s54
      %p56 = scmp.eq.s32.totalorder %s30, 0
      %p57 = por %p55, %p56
      %s59 = sadd.s32 %s58, 1
      %p62 = scmp.eq.s32.totalorder %s24, 1
      %p63 = scmp.ne.s32.totalorder %s58, %s60
      %p64 = scmp.eq.s32.totalorder %s24, 0
      %p65 = por %p63, %p64
      %p66 = scmp.ne.s32.totalorder %s58, %s60
      %p67 = scmp.eq.s32.totalorder %s29, 1
      %p68 = por %p66, %p67
      %p69 = scmp.ne.s32.totalorder %s60, %s61
      %p70 = scmp.eq.s32.totalorder %s29, 0
      %p71 = por %p69, %p70
      %p72 = scmp.ne.s32.totalorder %s60, %s61
      %p73 = scmp.eq.s32.totalorder %s30, 1
      %p74 = por %p72, %p73
      %p76 = scmp.ne.s32.totalorder %s61, %s75
      %p77 = scmp.eq.s32.totalorder %s30, 0
      %p78 = por %p76, %p77
      %s80 = sadd.s32 %s79, 1
      %p83 = scmp.eq.s32.totalorder %s24, 1
      %p84 = scmp.ne.s32.totalorder %s79, %s81
      %p85 = scmp.eq.s32.totalorder %s24, 0
      %p86 = por %p84, %p85
      %p87 = scmp.ne.s32.totalorder %s79, %s81
      %p88 = scmp.eq.s32.totalorder %s29, 1
      %p89 = por %p87, %p88
      %p90 = scmp.ne.s32.totalorder %s81, %s82
      %p91 = scmp.eq.s32.totalorder %s29, 0
      %p92 = por %p90, %p91
      %p93 = scmp.ne.s32.totalorder %s81, %s82
      %p94 = scmp.eq.s32.totalorder %s30, 1
      %p95 = por %p93, %p94
      %p97 = scmp.ne.s32.totalorder %s82, %s96
      %p98 = scmp.eq.s32.totalorder %s30, 0
      %p99 = por %p97, %p98
      %s101 = sadd.s32 %s100, 1
      %p104 = scmp.eq.s32.totalorder %s24, 1
      %p105 = scmp.ne.s32.totalorder %s100, %s102
      %p106 = scmp.eq.s32.totalorder %s24, 0
      %p107 = por %p105, %p106
      %p108 = scmp.ne.s32.totalorder %s100, %s102
      %p109 = scmp.eq.s32.totalorder %s29, 1
      %p110 = por %p108, %p109
      %p111 = scmp.ne.s32.totalorder %s102, %s103
      %p112 = scmp.eq.s32.totalorder %s29, 0
      %p113 = por %p111, %p112
      %p114 = scmp.ne.s32.totalorder %s102, %s103
      %p115 = scmp.eq.s32.totalorder %s30, 1
      %p116 = por %p114, %p115
      %p118 = scmp.ne.s32.totalorder %s103, %s117
      %p119 = scmp.eq.s32.totalorder %s30, 0
      %p120 = por %p118, %p119
      %s122 = sadd.s32 %s121, 1
      %p125 = scmp.eq.s32.totalorder %s24, 1
      %p126 = scmp.ne.s32.totalorder %s121, %s123
      %p127 = scmp.eq.s32.totalorder %s24, 0
      %p128 = por %p126, %p127
      %p129 = scmp.ne.s32.totalorder %s121, %s123
      %p130 = scmp.eq.s32.totalorder %s29, 1
      %p131 = por %p129, %p130
      %p132 = scmp.ne.s32.totalorder %s123, %s124
      %p133 = scmp.eq.s32.totalorder %s29, 0
      %p134 = por %p132, %p133
      %p135 = scmp.ne.s32.totalorder %s123, %s124
      %p136 = scmp.eq.s32.totalorder %s30, 1
      %p137 = por %p135, %p136
      %p139 = scmp.ne.s32.totalorder %s124, %s138
      %p140 = scmp.eq.s32.totalorder %s30, 0
      %p141 = por %p139, %p140
      %s143 = sadd.s32 %s142, 1
      %p146 = scmp.eq.s32.totalorder %s24, 1
      %p147 = scmp.ne.s32.totalorder %s142, %s144
      %p148 = scmp.eq.s32.totalorder %s24, 0
      %p149 = por %p147, %p148
      %p150 = scmp.ne.s32.totalorder %s142, %s144
      %p151 = scmp.eq.s32.totalorder %s29, 1
      %p152 = por %p150, %p151
      %p153 = scmp.ne.s32.totalorder %s144, %s145
      %p154 = scmp.eq.s32.totalorder %s29, 0
      %p155 = por %p153, %p154
      %p156 = scmp.ne.s32.totalorder %s144, %s145
      %p157 = scmp.eq.s32.totalorder %s30, 1
      %p158 = por %p156, %p157
      %p160 = scmp.ne.s32.totalorder %s145, %s159
      %p161 = scmp.eq.s32.totalorder %s30, 0
      %p162 = por %p160, %p161
      %s164 = sadd.s32 %s163, 1
      %p167 = scmp.eq.s32.totalorder %s24, 1
      %p168 = scmp.ne.s32.totalorder %s163, %s165
      %p169 = scmp.eq.s32.totalorder %s24, 0
      %p170 = por %p168, %p169
      %p171 = scmp.ne.s32.totalorder %s163, %s165
      %p172 = scmp.eq.s32.totalorder %s29, 1
      %p173 = por %p171, %p172
      %p174 = scmp.ne.s32.totalorder %s165, %s166
      %p175 = scmp.eq.s32.totalorder %s29, 0
      %p176 = por %p174, %p175
      %p177 = scmp.ne.s32.totalorder %s165, %s166
      %p178 = scmp.eq.s32.totalorder %s30, 1
      %p179 = por %p177, %p178
      %p181 = scmp.ne.s32.totalorder %s166, %s180
      %p182 = scmp.eq.s32.totalorder %s30, 0
      %p183 = por %p181, %p182
      %s185 = sadd.s32 %s184, 1
      %p188 = scmp.eq.s32.totalorder %s24, 1
      %p189 = scmp.ne.s32.totalorder %s184, %s186
      %p190 = scmp.eq.s32.totalorder %s24, 0
      %p191 = por %p189, %p190
      %p192 = scmp.ne.s32.totalorder %s184, %s186
      %p193 = scmp.eq.s32.totalorder %s29, 1
      %p194 = por %p192, %p193
      %p195 = scmp.ne.s32.totalorder %s186, %s187
      %p196 = scmp.eq.s32.totalorder %s29, 0
      %p197 = por %p195, %p196
      %p198 = scmp.ne.s32.totalorder %s186, %s187
      %p199 = scmp.eq.s32.totalorder %s30, 1
      %p200 = por %p198, %p199
      %p202 = scmp.ne.s32.totalorder %s187, %s201
      %p203 = scmp.eq.s32.totalorder %s30, 0
      %p204 = por %p202, %p203
      %s206 = sadd.s32 %s205, 1
      %p209 = scmp.eq.s32.totalorder %s24, 1
      %p210 = scmp.ne.s32.totalorder %s205, %s207
      %p211 = scmp.eq.s32.totalorder %s24, 0
      %p212 = por %p210, %p211
      %p213 = scmp.ne.s32.totalorder %s205, %s207
      %p214 = scmp.eq.s32.totalorder %s29, 1
      %p215 = por %p213, %p214
      %p216 = scmp.ne.s32.totalorder %s207, %s208
      %p217 = scmp.eq.s32.totalorder %s29, 0
      %p218 = por %p216, %p217
      %p219 = scmp.ne.s32.totalorder %s207, %s208
      %p220 = scmp.eq.s32.totalorder %s30, 1
      %p221 = por %p219, %p220
      %p223 = scmp.ne.s32.totalorder %s208, %s222
      %p224 = scmp.eq.s32.totalorder %s30, 0
      %p225 = por %p223, %p224
      %s227 = sadd.s32 %s226, 1
      %p230 = scmp.eq.s32.totalorder %s24, 1
      %p231 = scmp.ne.s32.totalorder %s226, %s228
      %p232 = scmp.eq.s32.totalorder %s24, 0
      %p233 = por %p231, %p232
      %p234 = scmp.ne.s32.totalorder %s226, %s228
      %p235 = scmp.eq.s32.totalorder %s29, 1
      %p236 = por %p234, %p235
      %p237 = scmp.ne.s32.totalorder %s228, %s229
      %p238 = scmp.eq.s32.totalorder %s29, 0
      %p239 = por %p237, %p238
      %p240 = scmp.ne.s32.totalorder %s228, %s229
      %p241 = scmp.eq.s32.totalorder %s30, 1
      %p242 = por %p240, %p241
      %p244 = scmp.ne.s32.totalorder %s229, %s243
      %p245 = scmp.eq.s32.totalorder %s30, 0
      %p246 = por %p244, %p245
      %s248 = sadd.s32 %s247, 1
      %p251 = scmp.eq.s32.totalorder %s24, 1
      %p252 = scmp.ne.s32.totalorder %s247, %s249
      %p253 = scmp.eq.s32.totalorder %s24, 0
      %p254 = por %p252, %p253
      %p255 = scmp.ne.s32.totalorder %s247, %s249
      %p256 = scmp.eq.s32.totalorder %s29, 1
      %p257 = por %p255, %p256
      %p258 = scmp.ne.s32.totalorder %s249, %s250
      %p259 = scmp.eq.s32.totalorder %s29, 0
      %p260 = por %p258, %p259
      %p261 = scmp.ne.s32.totalorder %s249, %s250
      %p262 = scmp.eq.s32.totalorder %s30, 1
      %p263 = por %p261, %p262
      %p265 = scmp.ne.s32.totalorder %s250, %s264
      %p266 = scmp.eq.s32.totalorder %s30, 0
      %p267 = por %p265, %p266
      %s268 = ssub.s32 %s24, %s31
      %p269 = scmp.eq.s32.totalorder %s268, 0
      %s271 = sadd.s32 %s270, 1
      %s272 = scalar_select %p269, %s270, %s271
      %p275 = pneg %p269
      %p276 = scmp.eq.s32.totalorder %s24, 1
      %p277 = por %p275, %p276
      %p278 = scmp.ne.s32.totalorder %s270, %s273
      %p279 = scmp.eq.s32.totalorder %s24, 0
      %p280 = por %p278, %p279
      %p281 = scmp.ne.s32.totalorder %s270, %s273
      %p282 = scmp.eq.s32.totalorder %s29, 1
      %p283 = por %p281, %p282
      %p284 = scmp.ne.s32.totalorder %s273, %s274
      %p285 = scmp.eq.s32.totalorder %s29, 0
      %p286 = por %p284, %p285
      %p287 = scmp.ne.s32.totalorder %s273, %s274
      %p288 = scmp.eq.s32.totalorder %s30, 1
      %p289 = por %p287, %p288
      %p291 = scmp.ne.s32.totalorder %s274, %s290
      %p292 = scmp.eq.s32.totalorder %s30, 0
      %p293 = por %p291, %p292
      %p294 = scmp.le.s32.totalorder 1, %s24
      %p295 = scmp.lt.s32.totalorder %s24, 3
      %p296 = pnand %p294, %p295
      %p297 = pneg %p296
      // Predicated region
      $region9: #{tpu_custom_call.1} parent=5 // pred_check
        _
      $region10: #{tpu_custom_call.1} parent=5 // pred_check_branch
        %299 = sbr.rel (%p296) target = $region12
      $region11: #{tpu_custom_call.1} parent=5 // pred_region
        %s300 = ssub.s32 %s24, 1
        // Predicated region
        $region13: #{tpu_custom_call.1} parent=11 // pred_check
          %p301 = pneg %p71
        $region14: #{tpu_custom_call.1} parent=11 // pred_check_branch
          %303 = sbr.rel (%p301) target = $region16
        $region15: #{tpu_custom_call.1} parent=11 // pred_region
          %s305 = ssub.s32 256, 256
          %306 = vsyncadd [#allocation3], %s305
          %s307 = sshll.u32 [#allocation2], 4
          %s308 = int_to_ptr.vmem [resolvable:$true] %s307
          %313 = dma.hbm_to_vmem [thread:$0]  %s1, 256, %s308, [#allocation3], 64, 64, 4
        $region16: #{tpu_custom_call.1} parent=11 // pred_fallthru
          _
        // Predicated region
        $region17: #{tpu_custom_call.1} parent=11 // pred_check
          %p314 = pneg %p92
        $region18: #{tpu_custom_call.1} parent=11 // pred_check_branch
          %316 = sbr.rel (%p314) target = $region20
        $region19: #{tpu_custom_call.1} parent=11 // pred_region
          %s318 = ssub.s32 16, 16
          %319 = vsyncadd [#allocation6], %s318
          %s321 = sshll.u32 [#allocation5], 4
          %s322 = int_to_ptr.vmem [resolvable:$true] %s321
          %324 = dma.hbm_to_vmem [thread:$0]  %s2, 16, %s322, [#allocation6]
        $region20: #{tpu_custom_call.1} parent=11 // pred_fallthru
          _
        // Predicated region
        $region21: #{tpu_custom_call.1} parent=11 // pred_check
          %p325 = pneg %p113
        $region22: #{tpu_custom_call.1} parent=11 // pred_check_branch
          %327 = sbr.rel (%p325) target = $region24
        $region23: #{tpu_custom_call.1} parent=11 // pred_region
          %s329 = ssub.s32 16, 16
          %330 = vsyncadd [#allocation6], %s329
          %s332 = sshll.u32 [#allocation7], 4
          %s333 = int_to_ptr.vmem [resolvable:$true] %s332
          %335 = dma.hbm_to_vmem [thread:$0]  %s3, 16, %s333, [#allocation6]
        $region24: #{tpu_custom_call.1} parent=11 // pred_fallthru
          _
        // Predicated region
        $region25: #{tpu_custom_call.1} parent=11 // pred_check
          %p336 = pneg %p134
        $region26: #{tpu_custom_call.1} parent=11 // pred_check_branch
          %338 = sbr.rel (%p336) target = $region28
        $region27: #{tpu_custom_call.1} parent=11 // pred_region
          %s340 = ssub.s32 16, 16
          %341 = vsyncadd [#allocation9], %s340
          %s343 = sshll.u32 [#allocation8], 4
          %s344 = int_to_ptr.vmem [resolvable:$true] %s343
          %346 = dma.hbm_to_vmem [thread:$0]  %s4, 16, %s344, [#allocation9]
        $region28: #{tpu_custom_call.1} parent=11 // pred_fallthru
          _
        // Predicated region
        $region29: #{tpu_custom_call.1} parent=11 // pred_check
          %p347 = pneg %p155
        $region30: #{tpu_custom_call.1} parent=11 // pred_check_branch
          %349 = sbr.rel (%p347) target = $region32
        $region31: #{tpu_custom_call.1} parent=11 // pred_region
          _
        $region32: #{tpu_custom_call.1} parent=11 // pred_fallthru
          _
        // Predicated region
        $region33: #{tpu_custom_call.1} parent=11 // pred_check
          %p350 = pneg %p176
        $region34: #{tpu_custom_call.1} parent=11 // pred_check_branch
          %352 = sbr.rel (%p350) target = $region36
        $region35: #{tpu_custom_call.1} parent=11 // pred_region
          %s354 = ssub.s32 16, 16
          %355 = vsyncadd [#allocation9], %s354
          %s357 = sshll.u32 [#allocation10], 4
          %s358 = int_to_ptr.vmem [resolvable:$true] %s357
          %360 = dma.hbm_to_vmem [thread:$0]  %s6, 16, %s358, [#allocation9]
        $region36: #{tpu_custom_call.1} parent=11 // pred_fallthru
          _
        // Predicated region
        $region37: #{tpu_custom_call.1} parent=11 // pred_check
          %p361 = pneg %p197
        $region38: #{tpu_custom_call.1} parent=11 // pred_check_branch
          %363 = sbr.rel (%p361) target = $region40
        $region39: #{tpu_custom_call.1} parent=11 // pred_region
          %s365 = ssub.s32 16, 16
          %366 = vsyncadd [#allocation12], %s365
          %s368 = sshll.u32 [#allocation11], 4
          %s369 = int_to_ptr.vmem [resolvable:$true] %s368
          %371 = dma.hbm_to_vmem [thread:$0]  %s7, 16, %s369, [#allocation12]
        $region40: #{tpu_custom_call.1} parent=11 // pred_fallthru
          _
        // Predicated region
        $region41: #{tpu_custom_call.1} parent=11 // pred_check
          %p372 = pneg %p218
        $region42: #{tpu_custom_call.1} parent=11 // pred_check_branch
          %374 = sbr.rel (%p372) target = $region44
        $region43: #{tpu_custom_call.1} parent=11 // pred_region
          %s376 = ssub.s32 16, 16
          %377 = vsyncadd [#allocation12], %s376
          %s379 = sshll.u32 [#allocation13], 4
          %s380 = int_to_ptr.vmem [resolvable:$true] %s379
          %382 = dma.hbm_to_vmem [thread:$0]  %s8, 16, %s380, [#allocation12]
        $region44: #{tpu_custom_call.1} parent=11 // pred_fallthru
          _
        // Predicated region
        $region45: #{tpu_custom_call.1} parent=11 // pred_check
          %p383 = pneg %p239
        $region46: #{tpu_custom_call.1} parent=11 // pred_check_branch
          %385 = sbr.rel (%p383) target = $region48
        $region47: #{tpu_custom_call.1} parent=11 // pred_region
          _
        $region48: #{tpu_custom_call.1} parent=11 // pred_fallthru
          _
        // Predicated region
        $region49: #{tpu_custom_call.1} parent=11 // pred_check
          %p386 = pneg %p260
        $region50: #{tpu_custom_call.1} parent=11 // pred_check_branch
          %388 = sbr.rel (%p386) target = $region52
        $region51: #{tpu_custom_call.1} parent=11 // pred_region
          _
        $region52: #{tpu_custom_call.1} parent=11 // pred_fallthru
          _
      $region12: #{tpu_custom_call.1} parent=5 // pred_fallthru
        _
      %p389 = scmp.lt.s32.totalorder %s24, 2
      // Predicated region
      $region53: #{tpu_custom_call.1} parent=5 // pred_check
        %p390 = pneg %p389
      $region54: #{tpu_custom_call.1} parent=5 // pred_check_branch
        %392 = sbr.rel (%p390) target = $region56
      $region55: #{tpu_custom_call.1} parent=5 // pred_region
        // Predicated region
        $region57: #{tpu_custom_call.1} parent=55 // pred_check
          %p393 = pneg %p44
        $region58: #{tpu_custom_call.1} parent=55 // pred_check_branch
          %395 = sbr.rel (%p393) target = $region60
        $region59: #{tpu_custom_call.1} parent=55 // pred_region
          %p396 = scmp.lt.s32.totalorder %s24, 1
          %s397 = scalar_select %p396, %s24, 1
          %s398 = smul.addr %s397, 8
          %s399 = scalar_lea.vmem %s0, %s398
        $region60: #{tpu_custom_call.1} parent=55 // pred_fallthru
          _
      $region56: #{tpu_custom_call.1} parent=5 // pred_fallthru
        _
      %p400 = scmp.le.s32.totalorder 1, %s24
      %p401 = scmp.lt.s32.totalorder %s24, 3
      %p402 = pnand %p400, %p401
      %p403 = pneg %p402
      // Predicated region
      $region61: #{tpu_custom_call.1} parent=5 // pred_check
        _
      $region62: #{tpu_custom_call.1} parent=5 // pred_check_branch
        %405 = sbr.rel (%p402) target = $region64
      $region63: #{tpu_custom_call.1} parent=5 // pred_region
        %s406 = ssub.s32 %s24, 1
        // Predicated region
        $region65: #{tpu_custom_call.1} parent=63 // pred_check
          %p407 = pneg %p71
        $region66: #{tpu_custom_call.1} parent=63 // pred_check_branch
          %409 = sbr.rel (%p407) target = $region68
        $region67: #{tpu_custom_call.1} parent=63 // pred_region
          %410 = dma.done [#allocation3], 256
        $region68: #{tpu_custom_call.1} parent=63 // pred_fallthru
          _
        // Predicated region
        $region69: #{tpu_custom_call.1} parent=63 // pred_check
          %p411 = pneg %p92
        $region70: #{tpu_custom_call.1} parent=63 // pred_check_branch
          %413 = sbr.rel (%p411) target = $region72
        $region71: #{tpu_custom_call.1} parent=63 // pred_region
          %414 = dma.done [#allocation6], 16
        $region72: #{tpu_custom_call.1} parent=63 // pred_fallthru
          _
        // Predicated region
        $region73: #{tpu_custom_call.1} parent=63 // pred_check
          %p415 = pneg %p113
        $region74: #{tpu_custom_call.1} parent=63 // pred_check_branch
          %417 = sbr.rel (%p415) target = $region76
        $region75: #{tpu_custom_call.1} parent=63 // pred_region
          %418 = dma.done [#allocation6], 16
        $region76: #{tpu_custom_call.1} parent=63 // pred_fallthru
          _
        // Predicated region
        $region77: #{tpu_custom_call.1} parent=63 // pred_check
          %p419 = pneg %p134
        $region78: #{tpu_custom_call.1} parent=63 // pred_check_branch
          %421 = sbr.rel (%p419) target = $region80
        $region79: #{tpu_custom_call.1} parent=63 // pred_region
          %422 = dma.done [#allocation9], 16
        $region80: #{tpu_custom_call.1} parent=63 // pred_fallthru
          _
        // Predicated region
        $region81: #{tpu_custom_call.1} parent=63 // pred_check
          %p423 = pneg %p176
        $region82: #{tpu_custom_call.1} parent=63 // pred_check_branch
          %425 = sbr.rel (%p423) target = $region84
        $region83: #{tpu_custom_call.1} parent=63 // pred_region
          %426 = dma.done [#allocation9], 16
        $region84: #{tpu_custom_call.1} parent=63 // pred_fallthru
          _
        // Predicated region
        $region85: #{tpu_custom_call.1} parent=63 // pred_check
          %p427 = pneg %p197
        $region86: #{tpu_custom_call.1} parent=63 // pred_check_branch
          %429 = sbr.rel (%p427) target = $region88
        $region87: #{tpu_custom_call.1} parent=63 // pred_region
          %430 = dma.done [#allocation12], 16
        $region88: #{tpu_custom_call.1} parent=63 // pred_fallthru
          _
        // Predicated region
        $region89: #{tpu_custom_call.1} parent=63 // pred_check
          %p431 = pneg %p218
        $region90: #{tpu_custom_call.1} parent=63 // pred_check_branch
          %433 = sbr.rel (%p431) target = $region92
        $region91: #{tpu_custom_call.1} parent=63 // pred_region
          %434 = dma.done [#allocation12], 16
        $region92: #{tpu_custom_call.1} parent=63 // pred_fallthru
          _
        %p435 = scmp.lt.s32.totalorder %s29, 1
        %s436 = scalar_select %p435, %s29, 1
        %s437 = smul.addr %s436, 8
        %s438 = scalar_lea.vmem %s0, %s437
        %p439 = pneg %p50
        %p440 = pneg %p47
        %p441 = pneg %p71
        %p442 = pneg %p68
        %p443 = pneg %p92
        %p444 = pneg %p89
        %p445 = pneg %p113
        %p446 = pneg %p110
        %p447 = pneg %p134
        %p448 = pneg %p131
        %p449 = pneg %p155
        %p450 = pneg %p152
        %p451 = pneg %p176
        %p452 = pneg %p173
        %p453 = pneg %p197
        %p454 = pneg %p194
        %p455 = pneg %p218
        %p456 = pneg %p215
        %p457 = pneg %p239
        %p458 = pneg %p236
        %p459 = pneg %p260
        %p460 = pneg %p257
        %p461 = pneg %p286
        %p462 = pneg %p283
        %s463 = sand.u32 %s273, 1
        %s464 = scalar_lea.sflag [#allocation4], %s463
        %s465 = sand.u32 %s273, 1
        %s466 = smul.addr %s465, 8
        %s467 = scalar_lea.vmem [#allocation14], %s466
        %p468 = scmp.lt.s32.totalorder %s29, 1
        %s469 = scalar_select %p468, %s29, 1
        %s470 = smul.addr %s469, 8
        %s471 = scalar_lea.vmem %s0, %s470
        %v473 = vld [vmem:[%s471] sm:$0xff]
        %v474 = vld [vmem:[#allocation2] sm:$0xf]
        %v475 = vld [vmem:[#allocation2 + $0x4] sm:$0xf]
        %v476 = vld [vmem:[#allocation2 + $0x8] sm:$0xf]
        %v477 = vld [vmem:[#allocation2 + $0xc] sm:$0xf]
        %v478 = vld [vmem:[#allocation5] sm:$0x1]
        %v479 = vpack.c.bf16 %v473, %v473
        %v481 = vlaneseq
        %v482 = vshrl.u32 %v481, 7
        %v483 = vsub.s32 0, %v482
        %v484 = vrot.slane %v478, %v483
        %v490 = vunpack.c.l.b16 %v474
        %v491 = vunpack.c.l.b16 %v475
        %v492 = vunpack.c.l.b16 %v476
        %v493 = vunpack.c.l.b16 %v477
        %v494 = vpack.c.b16 %v491, %v490
        %v495 = vpack.c.b16 %v493, %v492
        %vm498 = vcmask 261120
        %v500 = vsel %vm498, %v479, 0
        %502 = vmatprep.subr.bf16.mxu0 0
        %503 = vmatpush1.bf16.msra.mxu0 0
        %504 = vmatprep.subr.bf16.mxu0 0
        %505 = vmatpush1.bf16.msra.mxu0 0
        %506 = vmatprep.subr.bf16.mxu0 0
        %507 = vmatpush1.bf16.msra.mxu0 0
        %508 = vmatprep.subr.bf16.mxu0 0
        %509 = vmatpush1.bf16.msra.mxu0 0
        %510 = vmatprep.subr.bf16.mxu0 0
        %511 = vmatpush1.bf16.msra.mxu0 0
        %512 = vmatprep.subr.bf16.mxu0 0
        %513 = vmatpush1.bf16.msra.mxu0 0
        %514 = vmatprep.subr.bf16.mxu0 0
        %515 = vmatpush1.bf16.msra.mxu0 %v495
        %516 = vmatprep.subr.bf16.mxu0 0
        %517 = vmatpush1.bf16.msra.mxu0 %v494
        %518 = vmatprep.subr.bf16.mxu0 0
        %519 = vmatpush2.bf16.msra.mxu0 0
        %520 = vmatprep.subr.bf16.mxu0 0
        %521 = vmatpush2.bf16.msra.mxu0 0
        %522 = vmatprep.subr.bf16.mxu0 0
        %523 = vmatpush2.bf16.msra.mxu0 0
        %524 = vmatprep.subr.bf16.mxu0 0
        %525 = vmatpush2.bf16.msra.mxu0 0
        %526 = vmatprep.subr.bf16.mxu0 0
        %527 = vmatpush2.bf16.msra.mxu0 0
        %528 = vmatprep.subr.bf16.mxu0 0
        %529 = vmatpush2.bf16.msra.mxu0 0
        %530 = vmatprep.subr.bf16.mxu0 0
        %531 = vmatpush2.bf16.msra.mxu0 0
        %532 = vmatprep.subr.bf16.mxu0 0
        %533 = vmatpush2.bf16.msra.mxu0 0
        %534 = vmatprep.mubr.bf16.mxu0 0
        %535 = vmatmul.mubr.bf16.gmra.mxu0 %v500
        %v536 = vpop.f32.mrf.mxu0
        %v537 = vadd.f32 %v484, %v536
        %v538 = vpop.f32.mrf.mxu0
        %v539 = vpop.f32.mrf.mxu0
        %v540 = vpop.f32.mrf.mxu0
        %541 = vdwg.mxu0
        %v542 = vld [vmem:[#allocation7] sm:$0x1]
        %v543 = vld [vmem:[#allocation8] sm:$0x1]
        %544 = vadd.xlane.f32.xlu0 %v537
        %v545 = vpop.xlane.xlu0 %544
        %v546 = vmul.f32 %v545, 0.015625
        %v547 = vsub.f32 %v537, %v546
        %v548 = vlaneseq
        %v549 = vand.u32 %v548, 127
        %vm550 = vcmp.lt.s32.totalorder %v549, 64
        %v551 = vsel %vm550, %v547, 0.0
        %v552 = vmul.f32 %v551, %v551
        %553 = vadd.xlane.f32.xlu0 %v552
        %v554 = vpop.xlane.xlu0 %553
        %v555 = vmul.f32 %v554, 0.015625
        %v556 = vadd.f32 %v555, 1e-05
        %v557 = vrsqrt.pop %v556
        %v558 = vmul.f32 %v551, %v557
        %v560 = vlaneseq
        %v561 = vshrl.u32 %v560, 7
        %v562 = vsub.s32 0, %v561
        %v563 = vrot.slane %v542, %v562
        %v565 = vmul.f32 %v558, %v563
        %v567 = vlaneseq
        %v568 = vshrl.u32 %v567, 7
        %v569 = vsub.s32 0, %v568
        %v570 = vrot.slane %v543, %v569
        %v572 = vadd.f32 %v565, %v570
        %v573 = vmax.f32 %v572, 0.0
        %v574 = vld [vmem:[%s5] sm:$0xf]
        %v575 = vld [vmem:[%s5 + $0x4] sm:$0xf]
        %v576 = vld [vmem:[%s5 + $0x8] sm:$0xf]
        %v577 = vld [vmem:[%s5 + $0xc] sm:$0xf]
        %v578 = vld [vmem:[%s5 + $0x10] sm:$0xf]
        %v579 = vld [vmem:[%s5 + $0x14] sm:$0xf]
        %v580 = vld [vmem:[%s5 + $0x18] sm:$0xf]
        %v581 = vld [vmem:[%s5 + $0x1c] sm:$0xf]
        %v582 = vld [vmem:[%s5 + $0x20] sm:$0xf]
        %v583 = vld [vmem:[%s5 + $0x24] sm:$0xf]
        %v584 = vld [vmem:[%s5 + $0x28] sm:$0xf]
        %v585 = vld [vmem:[%s5 + $0x2c] sm:$0xf]
        %v586 = vld [vmem:[%s5 + $0x30] sm:$0xf]
        %v587 = vld [vmem:[%s5 + $0x34] sm:$0xf]
        %v588 = vld [vmem:[%s5 + $0x38] sm:$0xf]
        %v589 = vld [vmem:[%s5 + $0x3c] sm:$0xf]
        %v590 = vld [vmem:[#allocation10] sm:$0x1]
        %v591 = vpack.c.bf16 %v573, %v573
        %v593 = vlaneseq
        %v594 = vshrl.u32 %v593, 7
        %v595 = vsub.s32 0, %v594
        %v596 = vrot.slane %v590, %v595
        %v614 = vunpack.c.l.b16 %v574
        %v615 = vunpack.c.l.b16 %v575
        %v616 = vunpack.c.l.b16 %v576
        %v617 = vunpack.c.l.b16 %v577
        %v618 = vunpack.c.l.b16 %v578
        %v619 = vunpack.c.l.b16 %v579
        %v620 = vunpack.c.l.b16 %v580
        %v621 = vunpack.c.l.b16 %v581
        %v622 = vunpack.c.l.b16 %v582
        %v623 = vunpack.c.l.b16 %v583
        %v624 = vunpack.c.l.b16 %v584
        %v625 = vunpack.c.l.b16 %v585
        %v626 = vunpack.c.l.b16 %v586
        %v627 = vunpack.c.l.b16 %v587
        %v628 = vunpack.c.l.b16 %v588
        %v629 = vunpack.c.l.b16 %v589
        %v630 = vpack.c.b16 %v615, %v614
        %v631 = vpack.c.b16 %v617, %v616
        %v632 = vpack.c.b16 %v619, %v618
        %v633 = vpack.c.b16 %v621, %v620
        %v634 = vpack.c.b16 %v623, %v622
        %v635 = vpack.c.b16 %v625, %v624
        %v636 = vpack.c.b16 %v627, %v626
        %v637 = vpack.c.b16 %v629, %v628
        %646 = vmatprep.subr.bf16.mxu0 0
        %647 = vmatpush1.bf16.msra.mxu0 %v637
        %648 = vmatprep.subr.bf16.mxu0 0
        %649 = vmatpush1.bf16.msra.mxu0 %v636
        %650 = vmatprep.subr.bf16.mxu0 0
        %651 = vmatpush1.bf16.msra.mxu0 %v635
        %652 = vmatprep.subr.bf16.mxu0 0
        %653 = vmatpush1.bf16.msra.mxu0 %v634
        %654 = vmatprep.subr.bf16.mxu0 0
        %655 = vmatpush1.bf16.msra.mxu0 %v633
        %656 = vmatprep.subr.bf16.mxu0 0
        %657 = vmatpush1.bf16.msra.mxu0 %v632
        %658 = vmatprep.subr.bf16.mxu0 0
        %659 = vmatpush1.bf16.msra.mxu0 %v631
        %660 = vmatprep.subr.bf16.mxu0 0
        %661 = vmatpush1.bf16.msra.mxu0 %v630
        %662 = vmatprep.subr.bf16.mxu0 0
        %663 = vmatpush2.bf16.msra.mxu0 0
        %664 = vmatprep.subr.bf16.mxu0 0
        %665 = vmatpush2.bf16.msra.mxu0 0
        %666 = vmatprep.subr.bf16.mxu0 0
        %667 = vmatpush2.bf16.msra.mxu0 0
        %668 = vmatprep.subr.bf16.mxu0 0
        %669 = vmatpush2.bf16.msra.mxu0 0
        %670 = vmatprep.subr.bf16.mxu0 0
        %671 = vmatpush2.bf16.msra.mxu0 0
        %672 = vmatprep.subr.bf16.mxu0 0
        %673 = vmatpush2.bf16.msra.mxu0 0
        %674 = vmatprep.subr.bf16.mxu0 0
        %675 = vmatpush2.bf16.msra.mxu0 0
        %676 = vmatprep.subr.bf16.mxu0 0
        %677 = vmatpush2.bf16.msra.mxu0 0
        %678 = vmatprep.mubr.bf16.mxu0 0
        %679 = vmatmul.mubr.bf16.gmra.mxu0 %v591
        %v680 = vpop.f32.mrf.mxu0
        %v681 = vadd.f32 %v596, %v680
        %v682 = vpop.f32.mrf.mxu0
        %v683 = vpop.f32.mrf.mxu0
        %v684 = vpop.f32.mrf.mxu0
        %685 = vdwg.mxu0
        %v686 = vld [vmem:[#allocation11] sm:$0x1]
        %v687 = vld [vmem:[#allocation13] sm:$0x1]
        %688 = vadd.xlane.f32.xlu0 %v681
        %v689 = vpop.xlane.xlu0 %688
        %v690 = vmul.f32 %v689, 0.020833334
        %v691 = vsub.f32 %v681, %v690
        %vm692 = vcmp.lt.s32.totalorder %v549, 48
        %v693 = vsel %vm692, %v691, 0.0
        %v694 = vmul.f32 %v693, %v693
        %695 = vadd.xlane.f32.xlu0 %v694
        %v696 = vpop.xlane.xlu0 %695
        %v697 = vmul.f32 %v696, 0.020833334
        %v698 = vadd.f32 %v697, 1e-05
        %v699 = vrsqrt.pop %v698
        %v700 = vmul.f32 %v693, %v699
        %v702 = vlaneseq
        %v703 = vshrl.u32 %v702, 7
        %v704 = vsub.s32 0, %v703
        %v705 = vrot.slane %v686, %v704
        %v707 = vmul.f32 %v700, %v705
        %v709 = vlaneseq
        %v710 = vshrl.u32 %v709, 7
        %v711 = vsub.s32 0, %v710
        %v712 = vrot.slane %v687, %v711
        %v714 = vadd.f32 %v707, %v712
        %v715 = vmax.f32 %v714, 0.0
        %v716 = vld [vmem:[%s9] sm:$0xf]
        %v717 = vld [vmem:[%s9 + $0x4] sm:$0xf]
        %v718 = vld [vmem:[%s9 + $0x8] sm:$0xf]
        %v719 = vld [vmem:[%s9 + $0xc] sm:$0xf]
        %v720 = vld [vmem:[%s9 + $0x10] sm:$0xf]
        %v721 = vld [vmem:[%s9 + $0x14] sm:$0xf]
        %v722 = vld [vmem:[%s9 + $0x18] sm:$0xf]
        %v723 = vld [vmem:[%s9 + $0x1c] sm:$0xf]
        %v724 = vld [vmem:[%s9 + $0x20] sm:$0xf]
        %v725 = vld [vmem:[%s9 + $0x24] sm:$0xf]
        %v726 = vld [vmem:[%s9 + $0x28] sm:$0xf]
        %v727 = vld [vmem:[%s9 + $0x2c] sm:$0xf]
        %v728 = vld [vmem:[%s9 + $0x30] sm:$0xf]
        %v729 = vld [vmem:[%s9 + $0x34] sm:$0xf]
        %v730 = vld [vmem:[%s9 + $0x38] sm:$0xf]
        %v731 = vld [vmem:[%s9 + $0x3c] sm:$0xf]
        %v732 = vld [vmem:[%s10] sm:$0x1]
        %v733 = vpack.c.bf16 %v715, %v715
        %v735 = vlaneseq
        %v736 = vshrl.u32 %v735, 7
        %v737 = vsub.s32 0, %v736
        %v738 = vrot.slane %v732, %v737
        %v756 = vunpack.c.l.b16 %v716
        %v757 = vunpack.c.l.b16 %v717
        %v758 = vunpack.c.l.b16 %v718
        %v759 = vunpack.c.l.b16 %v719
        %v760 = vunpack.c.l.b16 %v720
        %v761 = vunpack.c.l.b16 %v721
        %v762 = vunpack.c.l.b16 %v722
        %v763 = vunpack.c.l.b16 %v723
        %v764 = vunpack.c.l.b16 %v724
        %v765 = vunpack.c.l.b16 %v725
        %v766 = vunpack.c.l.b16 %v726
        %v767 = vunpack.c.l.b16 %v727
        %v768 = vunpack.c.l.b16 %v728
        %v769 = vunpack.c.l.b16 %v729
        %v770 = vunpack.c.l.b16 %v730
        %v771 = vunpack.c.l.b16 %v731
        %v772 = vpack.c.b16 %v757, %v756
        %v773 = vpack.c.b16 %v759, %v758
        %v774 = vpack.c.b16 %v761, %v760
        %v775 = vpack.c.b16 %v763, %v762
        %v776 = vpack.c.b16 %v765, %v764
        %v777 = vpack.c.b16 %v767, %v766
        %v778 = vpack.c.b16 %v769, %v768
        %v779 = vpack.c.b16 %v771, %v770
        %788 = vmatprep.subr.bf16.mxu0 0
        %789 = vmatpush1.bf16.msra.mxu0 %v779
        %790 = vmatprep.subr.bf16.mxu0 0
        %791 = vmatpush1.bf16.msra.mxu0 %v778
        %792 = vmatprep.subr.bf16.mxu0 0
        %793 = vmatpush1.bf16.msra.mxu0 %v777
        %794 = vmatprep.subr.bf16.mxu0 0
        %795 = vmatpush1.bf16.msra.mxu0 %v776
        %796 = vmatprep.subr.bf16.mxu0 0
        %797 = vmatpush1.bf16.msra.mxu0 %v775
        %798 = vmatprep.subr.bf16.mxu0 0
        %799 = vmatpush1.bf16.msra.mxu0 %v774
        %800 = vmatprep.subr.bf16.mxu0 0
        %801 = vmatpush1.bf16.msra.mxu0 %v773
        %802 = vmatprep.subr.bf16.mxu0 0
        %803 = vmatpush1.bf16.msra.mxu0 %v772
        %804 = vmatprep.subr.bf16.mxu0 0
        %805 = vmatpush2.bf16.msra.mxu0 0
        %806 = vmatprep.subr.bf16.mxu0 0
        %807 = vmatpush2.bf16.msra.mxu0 0
        %808 = vmatprep.subr.bf16.mxu0 0
        %809 = vmatpush2.bf16.msra.mxu0 0
        %810 = vmatprep.subr.bf16.mxu0 0
        %811 = vmatpush2.bf16.msra.mxu0 0
        %812 = vmatprep.subr.bf16.mxu0 0
        %813 = vmatpush2.bf16.msra.mxu0 0
        %814 = vmatprep.subr.bf16.mxu0 0
        %815 = vmatpush2.bf16.msra.mxu0 0
        %816 = vmatprep.subr.bf16.mxu0 0
        %817 = vmatpush2.bf16.msra.mxu0 0
        %818 = vmatprep.subr.bf16.mxu0 0
        %819 = vmatpush2.bf16.msra.mxu0 0
        %820 = vmatprep.mubr.bf16.mxu0 0
        %821 = vmatmul.mubr.bf16.gmra.mxu0 %v733
        %v822 = vpop.f32.mrf.mxu0
        %v823 = vadd.f32 %v738, %v822
        %v824 = vpop.f32.mrf.mxu0
        %v825 = vpop.f32.mrf.mxu0
        %v826 = vpop.f32.mrf.mxu0
        %827 = vdwg.mxu0
        %vm828 = vcmask 130048
        %829 = vst.msk [vmem:[%s467] sm:$0xff] %vm828, %v823
        %s830 = sand.u32 %s273, 1
        %s831 = scalar_lea.sflag [#allocation4], %s830
        %s832 = sand.u32 %s273, 1
        %s833 = smul.addr %s832, 8
        %s834 = scalar_lea.vmem [#allocation14], %s833
        // Predicated region
        $region93: #{tpu_custom_call.1} parent=63 // pred_check
          %p835 = pneg %p283
        $region94: #{tpu_custom_call.1} parent=63 // pred_check_branch
          %837 = sbr.rel (%p835) target = $region96
        $region95: #{tpu_custom_call.1} parent=63 // pred_region
          %s839 = ssub.s32 128, 128
          %840 = vsyncadd %s831, %s839
          %s841 = smul.addr %s29, 128
          %s842 = scalar_lea.hbm %s11, %s841
          %s844 = sshll.u32 %s834, 4
          %s845 = int_to_ptr.vmem [resolvable:$true] %s844
          %847 = dma.vmem_to_hbm [thread:$0]  %s845, 128, %s842, %s831
        $region96: #{tpu_custom_call.1} parent=63 // pred_fallthru
          _
      $region64: #{tpu_custom_call.1} parent=5 // pred_fallthru
        _
      %p848 = scmp.le.s32.totalorder 2, %s24
      // Predicated region
      $region97: #{tpu_custom_call.1} parent=5 // pred_check
        %p849 = pneg %p848
      $region98: #{tpu_custom_call.1} parent=5 // pred_check_branch
        %851 = sbr.rel (%p849) target = $region100
      $region99: #{tpu_custom_call.1} parent=5 // pred_region
        %s852 = ssub.s32 %s24, 2
        // Predicated region
        $region101: #{tpu_custom_call.1} parent=99 // pred_check
          %p853 = pneg %p289
        $region102: #{tpu_custom_call.1} parent=99 // pred_check_branch
          %855 = sbr.rel (%p853) target = $region104
        $region103: #{tpu_custom_call.1} parent=99 // pred_region
          %s856 = sand.u32 %s274, 1
          %s857 = scalar_lea.sflag [#allocation4], %s856
          %s858 = sand.u32 %s274, 1
          %s859 = smul.addr %s858, 8
          %s860 = scalar_lea.vmem [#allocation14], %s859
          %861 = dma.done %s857, 128
        $region104: #{tpu_custom_call.1} parent=99 // pred_fallthru
          _
      $region100: #{tpu_custom_call.1} parent=5 // pred_fallthru
        _
    $region6: #{tpu_custom_call.1} parent=1 // loop_footer
      %s28 = sadd.s32 1, %s24
    $region7: #{tpu_custom_call.1} parent=1 // loop_footer_branch
      %23 = sbr.rel target = $region3
    $region8: #{tpu_custom_call.1} parent=1 // loop_exit
      _
    %862 = vsyncpa [#allocation3], 1
    %s863 = scalar_lea.sflag [#allocation3], 1
    %864 = vsyncpa %s863, 1
    %865 = vsyncpa [#allocation6], 1
    %866 = vsyncpa [#allocation9], 1
    %867 = vsyncpa [#allocation12], 1
    %868 = vsyncpa [#allocation4], 1
    %s869 = scalar_lea.sflag [#allocation4], 1
    %870 = vsyncpa %s869, 1

// kernel: tpu_custom_call.1
$region0: #{tpu_custom_call.1}
  #allocation0 [shape = 'u32[]', space=smem, size = 0x4, offset = 0x4, fixed_abs, tag = 'smem constant byte address 0x4 - core index']
  #allocation1 [shape = 'u32[144,128]{1,0:T(1,128)}', space=vmem, size = 0x12000, scoped, tag = 'internal scratch']
  %s0 = inlined_call_operand.vmem [shape: f32[16,32], index: 0, kind: input, shape index: {}]
  %s1 = inlined_call_operand.hbm [shape: bf16[32,128], index: 1, kind: input, shape index: {}]
  %s2 = inlined_call_operand.hbm [shape: f32[1,128], index: 2, kind: input, shape index: {}]
  %s3 = inlined_call_operand.hbm [shape: f32[1,128], index: 3, kind: input, shape index: {}]
  %s4 = inlined_call_operand.hbm [shape: f32[1,128], index: 4, kind: input, shape index: {}]
  %s5 = inlined_call_operand.vmem [shape: bf16[128,128], index: 5, kind: input, shape index: {}]
  %s6 = inlined_call_operand.hbm [shape: f32[1,128], index: 6, kind: input, shape index: {}]
  %s7 = inlined_call_operand.hbm [shape: f32[1,128], index: 7, kind: input, shape index: {}]
  %s8 = inlined_call_operand.hbm [shape: f32[1,128], index: 8, kind: input, shape index: {}]
  %s9 = inlined_call_operand.vmem [shape: bf16[128,16], index: 9, kind: input, shape index: {}]
  %s10 = inlined_call_operand.vmem [shape: f32[1,16], index: 10, kind: input, shape index: {}]
  %s11 = inlined_call_operand.hbm [shape: f32[16,16], index: 11, kind: output, shape index: {}]
  %s12 = sld [smem:[#allocation0]]
  $region105: #{tpu_custom_call.1} parent=0
    _
  %s14 = ssub.s32 1, %s12
  %s15 = scalar_select 0, %s14, %s12
  $region1: #{tpu_custom_call.1} parent=0
    #allocation2 [shape = 'u8[8192]{0}', space=vmem, size = 0x2000, scoped, tag = 'input window, operand 1, single buffered']
    #allocation3 [shape = 's32[2]{0}', space=sflag, size = 0x8, scoped, tag = 'scoped memory for tpu_custom_call.1']
    #allocation4 [shape = 's32[2]{0}', space=sflag, size = 0x8, scoped, tag = 'scoped memory for tpu_custom_call.1']
    #allocation5 [shape = 'u8[512]{0}', space=vmem, size = 0x400, scoped, tag = 'input window, operand 2, single buffered']
    #allocation6 [shape = 's32[1]{0}', space=sflag, size = 0x4, scoped, tag = 'scoped memory for tpu_custom_call.1']
    #allocation7 [shape = 'u8[512]{0}', space=vmem, size = 0x400, scoped, tag = 'input window, operand 3, single buffered']
    #allocation8 [shape = 'u8[512]{0}', space=vmem, size = 0x400, scoped, tag = 'input window, operand 4, single buffered']
    #allocation9 [shape = 's32[1]{0}', space=sflag, size = 0x4, scoped, tag = 'scoped memory for tpu_custom_call.1']
    #allocation10 [shape = 'u8[512]{0}', space=vmem, size = 0x400, scoped, tag = 'input window, operand 6, single buffered']
    #allocation11 [shape = 'u8[512]{0}', space=vmem, size = 0x400, scoped, tag = 'input window, operand 7, single buffered']
    #allocation12 [shape = 's32[1]{0}', space=sflag, size = 0x4, scoped, tag = 'scoped memory for tpu_custom_call.1']
    #allocation13 [shape = 'u8[512]{0}', space=vmem, size = 0x400, scoped, tag = 'input window, operand 8, single buffered']
    #allocation14 [shape = 'u8[8192]{0}', space=vmem, size = 0x2000, scoped, tag = 'output window, operand 0']
    %16 = vsyncpa [#allocation3], 0
    %17 = vsyncpa [#allocation6], 0
    %18 = vsyncpa [#allocation9], 0
    %19 = vsyncpa [#allocation12], 0
    %20 = vsyncpa [#allocation4], 0
    %s21 = scalar_lea.sflag [#allocation4], 1
    %22 = vsyncpa %s21, 0
    loop: start=0, step=1, limit=4
    $region2: #{tpu_custom_call.1} parent=1 // loop_pre_header
      _
    $region3: #{tpu_custom_call.1} parent=1 // loop_header
      %s24 = sphi 0, %s28
      %p25 = scmp.ge.s32.totalorder %s24, 4
      %s34 = sphi 0, %s36
      %s37 = sphi 0, %s34
      %s38 = sphi 0, %s37
      %s54 = sphi 0, %s38
      %s58 = sphi 0, %s58
      %s60 = sphi 0, %s58
      %s61 = sphi 0, %s60
      %s75 = sphi 0, %s61
      %s79 = sphi 0, %s79
      %s81 = sphi 0, %s79
      %s82 = sphi 0, %s81
      %s96 = sphi 0, %s82
      %s100 = sphi 0, %s100
      %s102 = sphi 0, %s100
      %s103 = sphi 0, %s102
      %s117 = sphi 0, %s103
      %s121 = sphi 0, %s121
      %s123 = sphi 0, %s121
      %s124 = sphi 0, %s123
      %s138 = sphi 0, %s124
      %s142 = sphi 0, %s142
      %s144 = sphi 0, %s142
      %s145 = sphi 0, %s144
      %s159 = sphi 0, %s145
      %s163 = sphi 0, %s163
      %s165 = sphi 0, %s163
      %s166 = sphi 0, %s165
      %s180 = sphi 0, %s166
      %s184 = sphi 0, %s184
      %s186 = sphi 0, %s184
      %s187 = sphi 0, %s186
      %s201 = sphi 0, %s187
      %s205 = sphi 0, %s205
      %s207 = sphi 0, %s205
      %s208 = sphi 0, %s207
      %s222 = sphi 0, %s208
      %s226 = sphi 0, %s226
      %s228 = sphi 0, %s226
      %s229 = sphi 0, %s228
      %s243 = sphi 0, %s229
      %s247 = sphi 0, %s247
      %s249 = sphi 0, %s247
      %s250 = sphi 0, %s249
      %s264 = sphi 0, %s250
      %s270 = sphi 0, %s272
      %s273 = sphi 0, %s270
      %s274 = sphi 0, %s273
      %s290 = sphi 0, %s274
    $region4: #{tpu_custom_call.1} parent=1 // loop_header_branch
      %27 = sbr.rel (%p25) target = $region8
    $region5: #{tpu_custom_call.1} parent=1 // loop_body
      %s29 = ssub.s32 %s24, 1
      %s30 = ssub.s32 %s24, 2
      %s31 = sadd.s32 %s24, 1
      %s32 = ssub.s32 %s24, %s31
      %p33 = scmp.eq.s32.totalorder %s32, 0
      %s35 = sadd.s32 %s34, 1
      %s36 = scalar_select %p33, %s34, %s35
      %p39 = pneg %p33
      %p40 = scmp.eq.s32.totalorder %s24, 1
      %p41 = por %p39, %p40
      %p42 = scmp.ne.s32.totalorder %s34, %s37
      %p43 = scmp.eq.s32.totalorder %s24, 0
      %p44 = por %p42, %p43
      %p45 = scmp.ne.s32.totalorder %s34, %s37
      %p46 = scmp.eq.s32.totalorder %s29, 1
      %p47 = por %p45, %p46
      %p48 = scmp.ne.s32.totalorder %s37, %s38
      %p49 = scmp.eq.s32.totalorder %s29, 0
      %p50 = por %p48, %p49
      %p51 = scmp.ne.s32.totalorder %s37, %s38
      %p52 = scmp.eq.s32.totalorder %s30, 1
      %p53 = por %p51, %p52
      %p55 = scmp.ne.s32.totalorder %s38, %s54
      %p56 = scmp.eq.s32.totalorder %s30, 0
      %p57 = por %p55, %p56
      %s59 = sadd.s32 %s58, 1
      %p62 = scmp.eq.s32.totalorder %s24, 1
      %p63 = scmp.ne.s32.totalorder %s58, %s60
      %p64 = scmp.eq.s32.totalorder %s24, 0
      %p65 = por %p63, %p64
      %p66 = scmp.ne.s32.totalorder %s58, %s60
      %p67 = scmp.eq.s32.totalorder %s29, 1
      %p68 = por %p66, %p67
      %p69 = scmp.ne.s32.totalorder %s60, %s61
      %p70 = scmp.eq.s32.totalorder %s29, 0
      %p71 = por %p69, %p70
      %p72 = scmp.ne.s32.totalorder %s60, %s61
      %p73 = scmp.eq.s32.totalorder %s30, 1
      %p74 = por %p72, %p73
      %p76 = scmp.ne.s32.totalorder %s61, %s75
      %p77 = scmp.eq.s32.totalorder %s30, 0
      %p78 = por %p76, %p77
      %s80 = sadd.s32 %s79, 1
      %p83 = scmp.eq.s32.totalorder %s24, 1
      %p84 = scmp.ne.s32.totalorder %s79, %s81
      %p85 = scmp.eq.s32.totalorder %s24, 0
      %p86 = por %p84, %p85
      %p87 = scmp.ne.s32.totalorder %s79, %s81
      %p88 = scmp.eq.s32.totalorder %s29, 1
      %p89 = por %p87, %p88
      %p90 = scmp.ne.s32.totalorder %s81, %s82
      %p91 = scmp.eq.s32.totalorder %s29, 0
      %p92 = por %p90, %p91
      %p93 = scmp.ne.s32.totalorder %s81, %s82
      %p94 = scmp.eq.s32.totalorder %s30, 1
      %p95 = por %p93, %p94
      %p97 = scmp.ne.s32.totalorder %s82, %s96
      %p98 = scmp.eq.s32.totalorder %s30, 0
      %p99 = por %p97, %p98
      %s101 = sadd.s32 %s100, 1
      %p104 = scmp.eq.s32.totalorder %s24, 1
      %p105 = scmp.ne.s32.totalorder %s100, %s102
      %p106 = scmp.eq.s32.totalorder %s24, 0
      %p107 = por %p105, %p106
      %p108 = scmp.ne.s32.totalorder %s100, %s102
      %p109 = scmp.eq.s32.totalorder %s29, 1
      %p110 = por %p108, %p109
      %p111 = scmp.ne.s32.totalorder %s102, %s103
      %p112 = scmp.eq.s32.totalorder %s29, 0
      %p113 = por %p111, %p112
      %p114 = scmp.ne.s32.totalorder %s102, %s103
      %p115 = scmp.eq.s32.totalorder %s30, 1
      %p116 = por %p114, %p115
      %p118 = scmp.ne.s32.totalorder %s103, %s117
      %p119 = scmp.eq.s32.totalorder %s30, 0
      %p120 = por %p118, %p119
      %s122 = sadd.s32 %s121, 1
      %p125 = scmp.eq.s32.totalorder %s24, 1
      %p126 = scmp.ne.s32.totalorder %s121, %s123
      %p127 = scmp.eq.s32.totalorder %s24, 0
      %p128 = por %p126, %p127
      %p129 = scmp.ne.s32.totalorder %s121, %s123
      %p130 = scmp.eq.s32.totalorder %s29, 1
      %p131 = por %p129, %p130
      %p132 = scmp.ne.s32.totalorder %s123, %s124
      %p133 = scmp.eq.s32.totalorder %s29, 0
      %p134 = por %p132, %p133
      %p135 = scmp.ne.s32.totalorder %s123, %s124
      %p136 = scmp.eq.s32.totalorder %s30, 1
      %p137 = por %p135, %p136
      %p139 = scmp.ne.s32.totalorder %s124, %s138
      %p140 = scmp.eq.s32.totalorder %s30, 0
      %p141 = por %p139, %p140
      %s143 = sadd.s32 %s142, 1
      %p146 = scmp.eq.s32.totalorder %s24, 1
      %p147 = scmp.ne.s32.totalorder %s142, %s144
      %p148 = scmp.eq.s32.totalorder %s24, 0
      %p149 = por %p147, %p148
      %p150 = scmp.ne.s32.totalorder %s142, %s144
      %p151 = scmp.eq.s32.totalorder %s29, 1
      %p152 = por %p150, %p151
      %p153 = scmp.ne.s32.totalorder %s144, %s145
      %p154 = scmp.eq.s32.totalorder %s29, 0
      %p155 = por %p153, %p154
      %p156 = scmp.ne.s32.totalorder %s144, %s145
      %p157 = scmp.eq.s32.totalorder %s30, 1
      %p158 = por %p156, %p157
      %p160 = scmp.ne.s32.totalorder %s145, %s159
      %p161 = scmp.eq.s32.totalorder %s30, 0
      %p162 = por %p160, %p161
      %s164 = sadd.s32 %s163, 1
      %p167 = scmp.eq.s32.totalorder %s24, 1
      %p168 = scmp.ne.s32.totalorder %s163, %s165
      %p169 = scmp.eq.s32.totalorder %s24, 0
      %p170 = por %p168, %p169
      %p171 = scmp.ne.s32.totalorder %s163, %s165
      %p172 = scmp.eq.s32.totalorder %s29, 1
      %p173 = por %p171, %p172
      %p174 = scmp.ne.s32.totalorder %s165, %s166
      %p175 = scmp.eq.s32.totalorder %s29, 0
      %p176 = por %p174, %p175
      %p177 = scmp.ne.s32.totalorder %s165, %s166
      %p178 = scmp.eq.s32.totalorder %s30, 1
      %p179 = por %p177, %p178
      %p181 = scmp.ne.s32.totalorder %s166, %s180
      %p182 = scmp.eq.s32.totalorder %s30, 0
      %p183 = por %p181, %p182
      %s185 = sadd.s32 %s184, 1
      %p188 = scmp.eq.s32.totalorder %s24, 1
      %p189 = scmp.ne.s32.totalorder %s184, %s186
      %p190 = scmp.eq.s32.totalorder %s24, 0
      %p191 = por %p189, %p190
      %p192 = scmp.ne.s32.totalorder %s184, %s186
      %p193 = scmp.eq.s32.totalorder %s29, 1
      %p194 = por %p192, %p193
      %p195 = scmp.ne.s32.totalorder %s186, %s187
      %p196 = scmp.eq.s32.totalorder %s29, 0
      %p197 = por %p195, %p196
      %p198 = scmp.ne.s32.totalorder %s186, %s187
      %p199 = scmp.eq.s32.totalorder %s30, 1
      %p200 = por %p198, %p199
      %p202 = scmp.ne.s32.totalorder %s187, %s201
      %p203 = scmp.eq.s32.totalorder %s30, 0
      %p204 = por %p202, %p203
      %s206 = sadd.s32 %s205, 1
      %p209 = scmp.eq.s32.totalorder %s24, 1
      %p210 = scmp.ne.s32.totalorder %s205, %s207
      %p211 = scmp.eq.s32.totalorder %s24, 0
      %p212 = por %p210, %p211
      %p213 = scmp.ne.s32.totalorder %s205, %s207
      %p214 = scmp.eq.s32.totalorder %s29, 1
      %p215 = por %p213, %p214
      %p216 = scmp.ne.s32.totalorder %s207, %s208
      %p217 = scmp.eq.s32.totalorder %s29, 0
      %p218 = por %p216, %p217
      %p219 = scmp.ne.s32.totalorder %s207, %s208
      %p220 = scmp.eq.s32.totalorder %s30, 1
      %p221 = por %p219, %p220
      %p223 = scmp.ne.s32.totalorder %s208, %s222
      %p224 = scmp.eq.s32.totalorder %s30, 0
      %p225 = por %p223, %p224
      %s227 = sadd.s32 %s226, 1
      %p230 = scmp.eq.s32.totalorder %s24, 1
      %p231 = scmp.ne.s32.totalorder %s226, %s228
      %p232 = scmp.eq.s32.totalorder %s24, 0
      %p233 = por %p231, %p232
      %p234 = scmp.ne.s32.totalorder %s226, %s228
      %p235 = scmp.eq.s32.totalorder %s29, 1
      %p236 = por %p234, %p235
      %p237 = scmp.ne.s32.totalorder %s228, %s229
      %p238 = scmp.eq.s32.totalorder %s29, 0
      %p239 = por %p237, %p238
      %p240 = scmp.ne.s32.totalorder %s228, %s229
      %p241 = scmp.eq.s32.totalorder %s30, 1
      %p242 = por %p240, %p241
      %p244 = scmp.ne.s32.totalorder %s229, %s243
      %p245 = scmp.eq.s32.totalorder %s30, 0
      %p246 = por %p244, %p245
      %s248 = sadd.s32 %s247, 1
      %p251 = scmp.eq.s32.totalorder %s24, 1
      %p252 = scmp.ne.s32.totalorder %s247, %s249
      %p253 = scmp.eq.s32.totalorder %s24, 0
      %p254 = por %p252, %p253
      %p255 = scmp.ne.s32.totalorder %s247, %s249
      %p256 = scmp.eq.s32.totalorder %s29, 1
      %p257 = por %p255, %p256
      %p258 = scmp.ne.s32.totalorder %s249, %s250
      %p259 = scmp.eq.s32.totalorder %s29, 0
      %p260 = por %p258, %p259
      %p261 = scmp.ne.s32.totalorder %s249, %s250
      %p262 = scmp.eq.s32.totalorder %s30, 1
      %p263 = por %p261, %p262
      %p265 = scmp.ne.s32.totalorder %s250, %s264
      %p266 = scmp.eq.s32.totalorder %s30, 0
      %p267 = por %p265, %p266
      %s268 = ssub.s32 %s24, %s31
      %p269 = scmp.eq.s32.totalorder %s268, 0
      %s271 = sadd.s32 %s270, 1
      %s272 = scalar_select %p269, %s270, %s271
      %p275 = pneg %p269
      %p276 = scmp.eq.s32.totalorder %s24, 1
      %p277 = por %p275, %p276
      %p278 = scmp.ne.s32.totalorder %s270, %s273
      %p279 = scmp.eq.s32.totalorder %s24, 0
      %p280 = por %p278, %p279
      %p281 = scmp.ne.s32.totalorder %s270, %s273
      %p282 = scmp.eq.s32.totalorder %s29, 1
      %p283 = por %p281, %p282
      %p284 = scmp.ne.s32.totalorder %s273, %s274
      %p285 = scmp.eq.s32.totalorder %s29, 0
      %p286 = por %p284, %p285
      %p287 = scmp.ne.s32.totalorder %s273, %s274
      %p288 = scmp.eq.s32.totalorder %s30, 1
      %p289 = por %p287, %p288
      %p291 = scmp.ne.s32.totalorder %s274, %s290
      %p292 = scmp.eq.s32.totalorder %s30, 0
      %p293 = por %p291, %p292
      %p294 = scmp.le.s32.totalorder 1, %s24
      %p295 = scmp.lt.s32.totalorder %s24, 3
      %p296 = pnand %p294, %p295
      %p297 = pneg %p296
      // Predicated region
      $region9: #{tpu_custom_call.1} parent=5 // pred_check
        _
      $region10: #{tpu_custom_call.1} parent=5 // pred_check_branch
        %299 = sbr.rel (%p296) target = $region12
      $region11: #{tpu_custom_call.1} parent=5 // pred_region
        %s300 = ssub.s32 %s24, 1
        // Predicated region
        $region13: #{tpu_custom_call.1} parent=11 // pred_check
          %p301 = pneg %p71
        $region14: #{tpu_custom_call.1} parent=11 // pred_check_branch
          %303 = sbr.rel (%p301) target = $region16
        $region15: #{tpu_custom_call.1} parent=11 // pred_region
          %s305 = ssub.s32 256, 256
          %306 = vsyncadd [#allocation3], %s305
          %s307 = sshll.u32 [#allocation2], 4
          %s308 = int_to_ptr.vmem [resolvable:$true] %s307
          %313 = dma.hbm_to_vmem [thread:$0]  %s1, 256, %s308, [#allocation3], 64, 64, 4
        $region16: #{tpu_custom_call.1} parent=11 // pred_fallthru
          _
        // Predicated region
        $region17: #{tpu_custom_call.1} parent=11 // pred_check
          %p314 = pneg %p92
        $region18: #{tpu_custom_call.1} parent=11 // pred_check_branch
          %316 = sbr.rel (%p314) target = $region20
        $region19: #{tpu_custom_call.1} parent=11 // pred_region
          %s318 = ssub.s32 16, 16
          %319 = vsyncadd [#allocation6], %s318
          %s321 = sshll.u32 [#allocation5], 4
          %s322 = int_to_ptr.vmem [resolvable:$true] %s321
          %324 = dma.hbm_to_vmem [thread:$0]  %s2, 16, %s322, [#allocation6]
        $region20: #{tpu_custom_call.1} parent=11 // pred_fallthru
          _
        // Predicated region
        $region21: #{tpu_custom_call.1} parent=11 // pred_check
          %p325 = pneg %p113
        $region22: #{tpu_custom_call.1} parent=11 // pred_check_branch
          %327 = sbr.rel (%p325) target = $region24
        $region23: #{tpu_custom_call.1} parent=11 // pred_region
          %s329 = ssub.s32 16, 16
          %330 = vsyncadd [#allocation6], %s329
          %s332 = sshll.u32 [#allocation7], 4
          %s333 = int_to_ptr.vmem [resolvable:$true] %s332
          %335 = dma.hbm_to_vmem [thread:$0]  %s3, 16, %s333, [#allocation6]
        $region24: #{tpu_custom_call.1} parent=11 // pred_fallthru
          _
        // Predicated region
        $region25: #{tpu_custom_call.1} parent=11 // pred_check
          %p336 = pneg %p134
        $region26: #{tpu_custom_call.1} parent=11 // pred_check_branch
          %338 = sbr.rel (%p336) target = $region28
        $region27: #{tpu_custom_call.1} parent=11 // pred_region
          %s340 = ssub.s32 16, 16
          %341 = vsyncadd [#allocation9], %s340
          %s343 = sshll.u32 [#allocation8], 4
          %s344 = int_to_ptr.vmem [resolvable:$true] %s343
          %346 = dma.hbm_to_vmem [thread:$0]  %s4, 16, %s344, [#allocation9]
        $region28: #{tpu_custom_call.1} parent=11 // pred_fallthru
          _
        // Predicated region
        $region29: #{tpu_custom_call.1} parent=11 // pred_check
          %p347 = pneg %p155
        $region30: #{tpu_custom_call.1} parent=11 // pred_check_branch
          %349 = sbr.rel (%p347) target = $region32
        $region31: #{tpu_custom_call.1} parent=11 // pred_region
          _
        $region32: #{tpu_custom_call.1} parent=11 // pred_fallthru
          _
        // Predicated region
        $region33: #{tpu_custom_call.1} parent=11 // pred_check
          %p350 = pneg %p176
        $region34: #{tpu_custom_call.1} parent=11 // pred_check_branch
          %352 = sbr.rel (%p350) target = $region36
        $region35: #{tpu_custom_call.1} parent=11 // pred_region
          %s354 = ssub.s32 16, 16
          %355 = vsyncadd [#allocation9], %s354
          %s357 = sshll.u32 [#allocation10], 4
          %s358 = int_to_ptr.vmem [resolvable:$true] %s357
          %360 = dma.hbm_to_vmem [thread:$0]  %s6, 16, %s358, [#allocation9]
        $region36: #{tpu_custom_call.1} parent=11 // pred_fallthru
          _
        // Predicated region
        $region37: #{tpu_custom_call.1} parent=11 // pred_check
          %p361 = pneg %p197
        $region38: #{tpu_custom_call.1} parent=11 // pred_check_branch
          %363 = sbr.rel (%p361) target = $region40
        $region39: #{tpu_custom_call.1} parent=11 // pred_region
          %s365 = ssub.s32 16, 16
          %366 = vsyncadd [#allocation12], %s365
          %s368 = sshll.u32 [#allocation11], 4
          %s369 = int_to_ptr.vmem [resolvable:$true] %s368
          %371 = dma.hbm_to_vmem [thread:$0]  %s7, 16, %s369, [#allocation12]
        $region40: #{tpu_custom_call.1} parent=11 // pred_fallthru
          _
        // Predicated region
        $region41: #{tpu_custom_call.1} parent=11 // pred_check
          %p372 = pneg %p218
        $region42: #{tpu_custom_call.1} parent=11 // pred_check_branch
          %374 = sbr.rel (%p372) target = $region44
        $region43: #{tpu_custom_call.1} parent=11 // pred_region
          %s376 = ssub.s32 16, 16
          %377 = vsyncadd [#allocation12], %s376
          %s379 = sshll.u32 [#allocation13], 4
          %s380 = int_to_ptr.vmem [resolvable:$true] %s379
          %382 = dma.hbm_to_vmem [thread:$0]  %s8, 16, %s380, [#allocation12]
        $region44: #{tpu_custom_call.1} parent=11 // pred_fallthru
          _
        // Predicated region
        $region45: #{tpu_custom_call.1} parent=11 // pred_check
          %p383 = pneg %p239
        $region46: #{tpu_custom_call.1} parent=11 // pred_check_branch
          %385 = sbr.rel (%p383) target = $region48
        $region47: #{tpu_custom_call.1} parent=11 // pred_region
          _
        $region48: #{tpu_custom_call.1} parent=11 // pred_fallthru
          _
        // Predicated region
        $region49: #{tpu_custom_call.1} parent=11 // pred_check
          %p386 = pneg %p260
        $region50: #{tpu_custom_call.1} parent=11 // pred_check_branch
          %388 = sbr.rel (%p386) target = $region52
        $region51: #{tpu_custom_call.1} parent=11 // pred_region
          _
        $region52: #{tpu_custom_call.1} parent=11 // pred_fallthru
          _
      $region12: #{tpu_custom_call.1} parent=5 // pred_fallthru
        _
      %p389 = scmp.lt.s32.totalorder %s24, 2
      // Predicated region
      $region53: #{tpu_custom_call.1} parent=5 // pred_check
        %p390 = pneg %p389
      $region54: #{tpu_custom_call.1} parent=5 // pred_check_branch
        %392 = sbr.rel (%p390) target = $region56
      $region55: #{tpu_custom_call.1} parent=5 // pred_region
        // Predicated region
        $region57: #{tpu_custom_call.1} parent=55 // pred_check
          %p393 = pneg %p44
        $region58: #{tpu_custom_call.1} parent=55 // pred_check_branch
          %395 = sbr.rel (%p393) target = $region60
        $region59: #{tpu_custom_call.1} parent=55 // pred_region
          %p396 = scmp.lt.s32.totalorder %s24, 1
          %s397 = scalar_select %p396, %s24, 1
          %s398 = smul.addr %s397, 8
          %s399 = scalar_lea.vmem %s0, %s398
        $region60: #{tpu_custom_call.1} parent=55 // pred_fallthru
          _
      $region56: #{tpu_custom_call.1} parent=5 // pred_fallthru
        _
      %p400 = scmp.le.s32.totalorder 1, %s24
      %p401 = scmp.lt.s32.totalorder %s24, 3
      %p402 = pnand %p400, %p401
      %p403 = pneg %p402
      // Predicated region
      $region61: #{tpu_custom_call.1} parent=5 // pred_check
        _
      $region62: #{tpu_custom_call.1} parent=5 // pred_check_branch
        %405 = sbr.rel (%p402) target = $region64
      $region63: #{tpu_custom_call.1} parent=5 // pred_region
        %s406 = ssub.s32 %s24, 1
        // Predicated region
        $region65: #{tpu_custom_call.1} parent=63 // pred_check
          %p407 = pneg %p71
        $region66: #{tpu_custom_call.1} parent=63 // pred_check_branch
          %409 = sbr.rel (%p407) target = $region68
        $region67: #{tpu_custom_call.1} parent=63 // pred_region
          %410 = dma.done [#allocation3], 256
        $region68: #{tpu_custom_call.1} parent=63 // pred_fallthru
          _
        // Predicated region
        $region69: #{tpu_custom_call.1} parent=63 // pred_check
          %p411 = pneg %p92
        $region70: #{tpu_custom_call.1} parent=63 // pred_check_branch
          %413 = sbr.rel (%p411) target = $region72
        $region71: #{tpu_custom_call.1} parent=63 // pred_region
          %414 = dma.done [#allocation6], 16
        $region72: #{tpu_custom_call.1} parent=63 // pred_fallthru
          _
        // Predicated region
        $region73: #{tpu_custom_call.1} parent=63 // pred_check
          %p415 = pneg %p113
        $region74: #{tpu_custom_call.1} parent=63 // pred_check_branch
          %417 = sbr.rel (%p415) target = $region76
        $region75: #{tpu_custom_call.1} parent=63 // pred_region
          %418 = dma.done [#allocation6], 16
        $region76: #{tpu_custom_call.1} parent=63 // pred_fallthru
          _
        // Predicated region
        $region77: #{tpu_custom_call.1} parent=63 // pred_check
          %p419 = pneg %p134
        $region78: #{tpu_custom_call.1} parent=63 // pred_check_branch
          %421 = sbr.rel (%p419) target = $region80
        $region79: #{tpu_custom_call.1} parent=63 // pred_region
          %422 = dma.done [#allocation9], 16
        $region80: #{tpu_custom_call.1} parent=63 // pred_fallthru
          _
        // Predicated region
        $region81: #{tpu_custom_call.1} parent=63 // pred_check
          %p423 = pneg %p176
        $region82: #{tpu_custom_call.1} parent=63 // pred_check_branch
          %425 = sbr.rel (%p423) target = $region84
        $region83: #{tpu_custom_call.1} parent=63 // pred_region
          %426 = dma.done [#allocation9], 16
        $region84: #{tpu_custom_call.1} parent=63 // pred_fallthru
          _
        // Predicated region
        $region85: #{tpu_custom_call.1} parent=63 // pred_check
          %p427 = pneg %p197
        $region86: #{tpu_custom_call.1} parent=63 // pred_check_branch
          %429 = sbr.rel (%p427) target = $region88
        $region87: #{tpu_custom_call.1} parent=63 // pred_region
          %430 = dma.done [#allocation12], 16
        $region88: #{tpu_custom_call.1} parent=63 // pred_fallthru
          _
        // Predicated region
        $region89: #{tpu_custom_call.1} parent=63 // pred_check
          %p431 = pneg %p218
        $region90: #{tpu_custom_call.1} parent=63 // pred_check_branch
          %433 = sbr.rel (%p431) target = $region92
        $region91: #{tpu_custom_call.1} parent=63 // pred_region
          %434 = dma.done [#allocation12], 16
        $region92: #{tpu_custom_call.1} parent=63 // pred_fallthru
          _
        %p435 = scmp.lt.s32.totalorder %s29, 1
        %s436 = scalar_select %p435, %s29, 1
        %s437 = smul.addr %s436, 8
        %s438 = scalar_lea.vmem %s0, %s437
        %p439 = pneg %p50
        %p440 = pneg %p47
        %p441 = pneg %p71
        %p442 = pneg %p68
        %p443 = pneg %p92
        %p444 = pneg %p89
        %p445 = pneg %p113
        %p446 = pneg %p110
        %p447 = pneg %p134
        %p448 = pneg %p131
        %p449 = pneg %p155
        %p450 = pneg %p152
        %p451 = pneg %p176
        %p452 = pneg %p173
        %p453 = pneg %p197
        %p454 = pneg %p194
        %p455 = pneg %p218
        %p456 = pneg %p215
        %p457 = pneg %p239
        %p458 = pneg %p236
        %p459 = pneg %p260
        %p460 = pneg %p257
        %p461 = pneg %p286
        %p462 = pneg %p283
        %s463 = sand.u32 %s273, 1
        %s464 = scalar_lea.sflag [#allocation4], %s463
        %s465 = sand.u32 %s273, 1
        %s466 = smul.addr %s465, 8
        %s467 = scalar_lea.vmem [#allocation14], %s466
        %p468 = scmp.lt.s32.totalorder %s29, 1
        %s469 = scalar_select %p468, %s29, 1
        %s470 = smul.addr %s469, 8
        %s471 = scalar_lea.vmem %s0, %s470
        %v473 = vld [vmem:[%s471] sm:$0xff]
        %v474 = vld [vmem:[#allocation2] sm:$0xf]
        %v475 = vld [vmem:[#allocation2 + $0x4] sm:$0xf]
        %v476 = vld [vmem:[#allocation2 + $0x8] sm:$0xf]
        %v477 = vld [vmem:[#allocation2 + $0xc] sm:$0xf]
        %v478 = vld [vmem:[#allocation5] sm:$0x1]
        %v479 = vpack.c.bf16 %v473, %v473
        %v481 = vlaneseq
        %v482 = vshrl.u32 %v481, 7
        %v483 = vsub.s32 0, %v482
        %v484 = vrot.slane %v478, %v483
        %v490 = vunpack.c.l.b16 %v474
        %v491 = vunpack.c.l.b16 %v475
        %v492 = vunpack.c.l.b16 %v476
        %v493 = vunpack.c.l.b16 %v477
        %v494 = vpack.c.b16 %v491, %v490
        %v495 = vpack.c.b16 %v493, %v492
        %vm498 = vcmask 261120
        %v500 = vsel %vm498, %v479, 0
        %502 = vmatprep.subr.bf16.mxu0 0
        %503 = vmatpush1.bf16.msra.mxu0 0
        %504 = vmatprep.subr.bf16.mxu0 0
        %505 = vmatpush1.bf16.msra.mxu0 0
        %506 = vmatprep.subr.bf16.mxu0 0
        %507 = vmatpush1.bf16.msra.mxu0 0
        %508 = vmatprep.subr.bf16.mxu0 0
        %509 = vmatpush1.bf16.msra.mxu0 0
        %510 = vmatprep.subr.bf16.mxu0 0
        %511 = vmatpush1.bf16.msra.mxu0 0
        %512 = vmatprep.subr.bf16.mxu0 0
        %513 = vmatpush1.bf16.msra.mxu0 0
        %514 = vmatprep.subr.bf16.mxu0 0
        %515 = vmatpush1.bf16.msra.mxu0 %v495
        %516 = vmatprep.subr.bf16.mxu0 0
        %517 = vmatpush1.bf16.msra.mxu0 %v494
        %518 = vmatprep.subr.bf16.mxu0 0
        %519 = vmatpush2.bf16.msra.mxu0 0
        %520 = vmatprep.subr.bf16.mxu0 0
        %521 = vmatpush2.bf16.msra.mxu0 0
        %522 = vmatprep.subr.bf16.mxu0 0
        %523 = vmatpush2.bf16.msra.mxu0 0
        %524 = vmatprep.subr.bf16.mxu0 0
        %525 = vmatpush2.bf16.msra.mxu0 0
        %526 = vmatprep.subr.bf16.mxu0 0
        %527 = vmatpush2.bf16.msra.mxu0 0
        %528 = vmatprep.subr.bf16.mxu0 0
        %529 = vmatpush2.bf16.msra.mxu0 0
        %530 = vmatprep.subr.bf16.mxu0 0
        %531 = vmatpush2.bf16.msra.mxu0 0
        %532 = vmatprep.subr.bf16.mxu0 0
        %533 = vmatpush2.bf16.msra.mxu0 0
        %534 = vmatprep.mubr.bf16.mxu0 0
        %535 = vmatmul.mubr.bf16.gmra.mxu0 %v500
        %v536 = vpop.f32.mrf.mxu0
        %v537 = vadd.f32 %v484, %v536
        %v538 = vpop.f32.mrf.mxu0
        %v539 = vpop.f32.mrf.mxu0
        %v540 = vpop.f32.mrf.mxu0
        %541 = vdwg.mxu0
        %v542 = vld [vmem:[#allocation7] sm:$0x1]
        %v543 = vld [vmem:[#allocation8] sm:$0x1]
        %544 = vadd.xlane.f32.xlu0 %v537
        %v545 = vpop.xlane.xlu0 %544
        %v546 = vmul.f32 %v545, 0.015625
        %v547 = vsub.f32 %v537, %v546
        %v548 = vlaneseq
        %v549 = vand.u32 %v548, 127
        %vm550 = vcmp.lt.s32.totalorder %v549, 64
        %v551 = vsel %vm550, %v547, 0.0
        %v552 = vmul.f32 %v551, %v551
        %553 = vadd.xlane.f32.xlu0 %v552
        %v554 = vpop.xlane.xlu0 %553
        %v555 = vmul.f32 %v554, 0.015625
        %v556 = vadd.f32 %v555, 1e-05
        %v557 = vrsqrt.pop %v556
        %v558 = vmul.f32 %v551, %v557
        %v560 = vlaneseq
        %v561 = vshrl.u32 %v560, 7
        %v562 = vsub.s32 0, %v561
        %v563 = vrot.slane %v542, %v562
        %v565 = vmul.f32 %v558, %v563
        %v567 = vlaneseq
        %v568 = vshrl.u32 %v567, 7
        %v569 = vsub.s32 0, %v568
        %v570 = vrot.slane %v543, %v569
        %v572 = vadd.f32 %v565, %v570
        %v573 = vmax.f32 %v572, 0.0
        %v574 = vld [vmem:[%s5] sm:$0xf]
        %v575 = vld [vmem:[%s5 + $0x4] sm:$0xf]
        %v576 = vld [vmem:[%s5 + $0x8] sm:$0xf]
        %v577 = vld [vmem:[%s5 + $0xc] sm:$0xf]
        %v578 = vld [vmem:[%s5 + $0x10] sm:$0xf]
        %v579 = vld [vmem:[%s5 + $0x14] sm:$0xf]
        %v580 = vld [vmem:[%s5 + $0x18] sm:$0xf]
        %v581 = vld [vmem:[%s5 + $0x1c] sm:$0xf]
        %v582 = vld [vmem:[%s5 + $0x20] sm:$0xf]
        %v583 = vld [vmem:[%s5 + $0x24] sm:$0xf]
        %v584 = vld [vmem:[%s5 + $0x28] sm:$0xf]
        %v585 = vld [vmem:[%s5 + $0x2c] sm:$0xf]
        %v586 = vld [vmem:[%s5 + $0x30] sm:$0xf]
        %v587 = vld [vmem:[%s5 + $0x34] sm:$0xf]
        %v588 = vld [vmem:[%s5 + $0x38] sm:$0xf]
        %v589 = vld [vmem:[%s5 + $0x3c] sm:$0xf]
        %v590 = vld [vmem:[#allocation10] sm:$0x1]
        %v591 = vpack.c.bf16 %v573, %v573
        %v593 = vlaneseq
        %v594 = vshrl.u32 %v593, 7
        %v595 = vsub.s32 0, %v594
        %v596 = vrot.slane %v590, %v595
        %v614 = vunpack.c.l.b16 %v574
        %v615 = vunpack.c.l.b16 %v575
        %v616 = vunpack.c.l.b16 %v576
        %v617 = vunpack.c.l.b16 %v577
        %v618 = vunpack.c.l.b16 %v578
        %v619 = vunpack.c.l.b16 %v579
        %v620 = vunpack.c.l.b16 %v580
        %v621 = vunpack.c.l.b16 %v581
        %v622 = vunpack.c.l.b16 %v582
        %v623 = vunpack.c.l.b16 %v583
        %v624 = vunpack.c.l.b16 %v584
        %v625 = vunpack.c.l.b16 %v585
        %v626 = vunpack.c.l.b16 %v586
        %v627 = vunpack.c.l.b16 %v587
        %v628 = vunpack.c.l.b16 %v588
        %v629 = vunpack.c.l.b16 %v589
        %v630 = vpack.c.b16 %v615, %v614
        %v631 = vpack.c.b16 %v617, %v616
        %v632 = vpack.c.b16 %v619, %v618
        %v633 = vpack.c.b16 %v621, %v620
        %v634 = vpack.c.b16 %v623, %v622
        %v635 = vpack.c.b16 %v625, %v624
        %v636 = vpack.c.b16 %v627, %v626
        %v637 = vpack.c.b16 %v629, %v628
        %646 = vmatprep.subr.bf16.mxu0 0
        %647 = vmatpush1.bf16.msra.mxu0 %v637
        %648 = vmatprep.subr.bf16.mxu0 0
        %649 = vmatpush1.bf16.msra.mxu0 %v636
        %650 = vmatprep.subr.bf16.mxu0 0
        %651 = vmatpush1.bf16.msra.mxu0 %v635
        %652 = vmatprep.subr.bf16.mxu0 0
        %653 = vmatpush1.bf16.msra.mxu0 %v634
        %654 = vmatprep.subr.bf16.mxu0 0
        %655 = vmatpush1.bf16.msra.mxu0 %v633
        %656 = vmatprep.subr.bf16.mxu0 0
        %657 = vmatpush1.bf16.msra.mxu0 %v632
        %658 = vmatprep.subr.bf16.mxu0 0
        %659 = vmatpush1.bf16.msra.mxu0 %v631
        %660 = vmatprep.subr.bf16.mxu0 0
        %661 = vmatpush1.bf16.msra.mxu0 %v630
        %662 = vmatprep.subr.bf16.mxu0 0
        %663 = vmatpush2.bf16.msra.mxu0 0
        %664 = vmatprep.subr.bf16.mxu0 0
        %665 = vmatpush2.bf16.msra.mxu0 0
        %666 = vmatprep.subr.bf16.mxu0 0
        %667 = vmatpush2.bf16.msra.mxu0 0
        %668 = vmatprep.subr.bf16.mxu0 0
        %669 = vmatpush2.bf16.msra.mxu0 0
        %670 = vmatprep.subr.bf16.mxu0 0
        %671 = vmatpush2.bf16.msra.mxu0 0
        %672 = vmatprep.subr.bf16.mxu0 0
        %673 = vmatpush2.bf16.msra.mxu0 0
        %674 = vmatprep.subr.bf16.mxu0 0
        %675 = vmatpush2.bf16.msra.mxu0 0
        %676 = vmatprep.subr.bf16.mxu0 0
        %677 = vmatpush2.bf16.msra.mxu0 0
        %678 = vmatprep.mubr.bf16.mxu0 0
        %679 = vmatmul.mubr.bf16.gmra.mxu0 %v591
        %v680 = vpop.f32.mrf.mxu0
        %v681 = vadd.f32 %v596, %v680
        %v682 = vpop.f32.mrf.mxu0
        %v683 = vpop.f32.mrf.mxu0
        %v684 = vpop.f32.mrf.mxu0
        %685 = vdwg.mxu0
        %v686 = vld [vmem:[#allocation11] sm:$0x1]
        %v687 = vld [vmem:[#allocation13] sm:$0x1]
        %688 = vadd.xlane.f32.xlu0 %v681
        %v689 = vpop.xlane.xlu0 %688
        %v690 = vmul.f32 %v689, 0.020833334
        %v691 = vsub.f32 %v681, %v690
        %vm692 = vcmp.lt.s32.totalorder %v549, 48
        %v693 = vsel %vm692, %v691, 0.0
        %v694 = vmul.f32 %v693, %v693
        %695 = vadd.xlane.f32.xlu0 %v694
        %v696 = vpop.xlane.xlu0 %695
        %v697 = vmul.f32 %v696, 0.020833334
        %v698 = vadd.f32 %v697, 1e-05
        %v699 = vrsqrt.pop %v698
        %v700 = vmul.f32 %v693, %v699
        %v702 = vlaneseq
        %v703 = vshrl.u32 %v702, 7
        %v704 = vsub.s32 0, %v703
        %v705 = vrot.slane %v686, %v704
        %v707 = vmul.f32 %v700, %v705
        %v709 = vlaneseq
        %v710 = vshrl.u32 %v709, 7
        %v711 = vsub.s32 0, %v710
        %v712 = vrot.slane %v687, %v711
        %v714 = vadd.f32 %v707, %v712
        %v715 = vmax.f32 %v714, 0.0
        %v716 = vld [vmem:[%s9] sm:$0xf]
        %v717 = vld [vmem:[%s9 + $0x4] sm:$0xf]
        %v718 = vld [vmem:[%s9 + $0x8] sm:$0xf]
        %v719 = vld [vmem:[%s9 + $0xc] sm:$0xf]
        %v720 = vld [vmem:[%s9 + $0x10] sm:$0xf]
        %v721 = vld [vmem:[%s9 + $0x14] sm:$0xf]
        %v722 = vld [vmem:[%s9 + $0x18] sm:$0xf]
        %v723 = vld [vmem:[%s9 + $0x1c] sm:$0xf]
        %v724 = vld [vmem:[%s9 + $0x20] sm:$0xf]
        %v725 = vld [vmem:[%s9 + $0x24] sm:$0xf]
        %v726 = vld [vmem:[%s9 + $0x28] sm:$0xf]
        %v727 = vld [vmem:[%s9 + $0x2c] sm:$0xf]
        %v728 = vld [vmem:[%s9 + $0x30] sm:$0xf]
        %v729 = vld [vmem:[%s9 + $0x34] sm:$0xf]
        %v730 = vld [vmem:[%s9 + $0x38] sm:$0xf]
        %v731 = vld [vmem:[%s9 + $0x3c] sm:$0xf]
        %v732 = vld [vmem:[%s10] sm:$0x1]
        %v733 = vpack.c.bf16 %v715, %v715
        %v735 = vlaneseq
        %v736 = vshrl.u32 %v735, 7
        %v737 = vsub.s32 0, %v736
        %v738 = vrot.slane %v732, %v737
        %v756 = vunpack.c.l.b16 %v716
        %v757 = vunpack.c.l.b16 %v717
        %v758 = vunpack.c.l.b16 %v718
        %v759 = vunpack.c.l.b16 %v719
        %v760 = vunpack.c.l.b16 %v720
        %v761 = vunpack.c.l.b16 %v721
        %v762 = vunpack.c.l.b16 %v722
        %v763 = vunpack.c.l.b16 %v723
        %v764 = vunpack.c.l.b16 %v724
        %v765 = vunpack.c.l.b16 %v725
        %v766 = vunpack.c.l.b16 %v726
        %v767 = vunpack.c.l.b16 %v727
        %v768 = vunpack.c.l.b16 %v728
        %v769 = vunpack.c.l.b16 %v729
        %v770 = vunpack.c.l.b16 %v730
        %v771 = vunpack.c.l.b16 %v731
        %v772 = vpack.c.b16 %v757, %v756
        %v773 = vpack.c.b16 %v759, %v758
        %v774 = vpack.c.b16 %v761, %v760
        %v775 = vpack.c.b16 %v763, %v762
        %v776 = vpack.c.b16 %v765, %v764
        %v777 = vpack.c.b16 %v767, %v766
        %v778 = vpack.c.b16 %v769, %v768
        %v779 = vpack.c.b16 %v771, %v770
        %788 = vmatprep.subr.bf16.mxu0 0
        %789 = vmatpush1.bf16.msra.mxu0 %v779
        %790 = vmatprep.subr.bf16.mxu0 0
        %791 = vmatpush1.bf16.msra.mxu0 %v778
        %792 = vmatprep.subr.bf16.mxu0 0
        %793 = vmatpush1.bf16.msra.mxu0 %v777
        %794 = vmatprep.subr.bf16.mxu0 0
        %795 = vmatpush1.bf16.msra.mxu0 %v776
        %796 = vmatprep.subr.bf16.mxu0 0
        %797 = vmatpush1.bf16.msra.mxu0 %v775
        %798 = vmatprep.subr.bf16.mxu0 0
        %799 = vmatpush1.bf16.msra.mxu0 %v774
        %800 = vmatprep.subr.bf16.mxu0 0
        %801 = vmatpush1.bf16.msra.mxu0 %v773
        %802 = vmatprep.subr.bf16.mxu0 0
        %803 = vmatpush1.bf16.msra.mxu0 %v772
        %804 = vmatprep.subr.bf16.mxu0 0
        %805 = vmatpush2.bf16.msra.mxu0 0
        %806 = vmatprep.subr.bf16.mxu0 0
        %807 = vmatpush2.bf16.msra.mxu0 0
        %808 = vmatprep.subr.bf16.mxu0 0
        %809 = vmatpush2.bf16.msra.mxu0 0
        %810 = vmatprep.subr.bf16.mxu0 0
        %811 = vmatpush2.bf16.msra.mxu0 0
        %812 = vmatprep.subr.bf16.mxu0 0
        %813 = vmatpush2.bf16.msra.mxu0 0
        %814 = vmatprep.subr.bf16.mxu0 0
        %815 = vmatpush2.bf16.msra.mxu0 0
        %816 = vmatprep.subr.bf16.mxu0 0
        %817 = vmatpush2.bf16.msra.mxu0 0
        %818 = vmatprep.subr.bf16.mxu0 0
        %819 = vmatpush2.bf16.msra.mxu0 0
        %820 = vmatprep.mubr.bf16.mxu0 0
        %821 = vmatmul.mubr.bf16.gmra.mxu0 %v733
        %v822 = vpop.f32.mrf.mxu0
        %v823 = vadd.f32 %v738, %v822
        %v824 = vpop.f32.mrf.mxu0
        %v825 = vpop.f32.mrf.mxu0
        %v826 = vpop.f32.mrf.mxu0
        %827 = vdwg.mxu0
        %vm828 = vcmask 130048
        %829 = vst.msk [vmem:[%s467] sm:$0xff] %vm828, %v823
        %s830 = sand.u32 %s273, 1
        %s831 = scalar_lea.sflag [#allocation4], %s830
        %s832 = sand.u32 %s273, 1
        %s833 = smul.addr %s832, 8
        %s834 = scalar_lea.vmem [#allocation14], %s833
        // Predicated region
        $region93: #{tpu_custom_call.1} parent=63 // pred_check
          %p835 = pneg %p283
        $region94: #{tpu_custom_call.1} parent=63 // pred_check_branch
          %837 = sbr.rel (%p835) target = $region96
        $region95: #{tpu_custom_call.1} parent=63 // pred_region
          %s839 = ssub.s32 128, 128
          %840 = vsyncadd %s831, %s839
          %s841 = smul.addr %s29, 128
          %s842 = scalar_lea.hbm %s11, %s841
          %s844 = sshll.u32 %s834, 4
          %s845 = int_to_ptr.vmem [resolvable:$true] %s844
          %847 = dma.vmem_to_hbm [thread:$0]  %s845, 128, %s842, %s831
        $region96: #{tpu_custom_call.1} parent=63 // pred_fallthru
          _
      $region64: #{tpu_custom_call.1} parent=5 // pred_fallthru
        _
      %p848 = scmp.le.s32.totalorder 2, %s24
      // Predicated region
      $region97: #{tpu_custom_call.1} parent=5 // pred_check
        %p849 = pneg %p848
      $region98: #{tpu_custom_call.1} parent=5 // pred_check_branch
        %851 = sbr.rel (%p849) target = $region100
      $region99: #{tpu_custom_call.1} parent=5 // pred_region
        %s852 = ssub.s32 %s24, 2
        // Predicated region
        $region101: #{tpu_custom_call.1} parent=99 // pred_check
          %p853 = pneg %p289
        $region102: #{tpu_custom_call.1} parent=99 // pred_check_branch
          %855 = sbr.rel (%p853) target = $region104
        $region103: #{tpu_custom_call.1} parent=99 // pred_region
          %s856 = sand.u32 %s274, 1
          %s857 = scalar_lea.sflag [#allocation4], %s856
          %s858 = sand.u32 %s274, 1
          %s859 = smul.addr %s858, 8
          %s860 = scalar_lea.vmem [#allocation14], %s859
          %861 = dma.done %s857, 128
        $region104: #{tpu_custom_call.1} parent=99 // pred_fallthru
          _
      $region100: #{tpu_custom_call.1} parent=5 // pred_fallthru
        _
    $region6: #{tpu_custom_call.1} parent=1 // loop_footer
      %s28 = sadd.s32 1, %s24
    $region7: #{tpu_custom_call.1} parent=1 // loop_footer_branch
      %23 = sbr.rel target = $region3
    $region8: #{tpu_custom_call.1} parent=1 // loop_exit
      _
    %862 = vsyncpa [#allocation3], 1
    %s863 = scalar_lea.sflag [#allocation3], 1
    %864 = vsyncpa %s863, 1
    %865 = vsyncpa [#allocation6], 1
    %866 = vsyncpa [#allocation9], 1
    %867 = vsyncpa [#allocation12], 1
    %868 = vsyncpa [#allocation4], 1
    %s869 = scalar_lea.sflag [#allocation4], 1
    %870 = vsyncpa %s869, 1

</llo_original>
